<compile_context>
chip_gen: v7x
topology: tpu7x:2x2x1
jax: 0.10.0
libtpu: 0.0.40
codegen_flags: <defaults>
</compile_context>

<pallas_src>
import functools
import math

import jax
import jax.numpy as jnp
from jax.experimental import pallas as pl
from jax.experimental.pallas import tpu as pltpu

NUM_CLASSES = 17       # opt.nClasses (small deterministic choice: COCO keypoints)
SE_REDUCTION = 1       # AlphaPose SELayer default: reduction=1
RESNET101_LAYERS = [(64, 3, 1), (128, 4, 2), (256, 23, 2), (512, 3, 2)]


def _round_up(x, m):
    return ((x + m - 1) // m) * m


def _pick(dim, candidates):
    """Largest candidate tile that divides `dim`, else the full dim (no padding)."""
    for c in candidates:
        if dim % c == 0:
            return c
    return dim


# ---------------------------------------------------------------------------
# Pallas kernels
# ---------------------------------------------------------------------------
def _matmul_kernel(*refs, act, has_res):
    """Tiled Y = act((X @ W) * scale + bias [+ residual]); bf16 in, f32 acc."""
    if has_res:
        x_ref, w_ref, s_ref, b_ref, r_ref, o_ref, acc_ref = refs
    else:
        x_ref, w_ref, s_ref, b_ref, o_ref, acc_ref = refs
        r_ref = None

    @pl.when(pl.program_id(2) == 0)
    def _():
        acc_ref[...] = jnp.zeros_like(acc_ref)

    acc_ref[...] += jnp.dot(x_ref[...], w_ref[...],
                            preferred_element_type=jnp.float32)

    @pl.when(pl.program_id(2) == pl.num_programs(2) - 1)
    def _():
        y = acc_ref[...] * s_ref[...] + b_ref[...]
        if has_res:
            y = y + r_ref[...].astype(jnp.float32)
        if act == "relu":
            y = jnp.maximum(y, 0.0)
        elif act == "sigmoid":
            y = jax.nn.sigmoid(y)
        o_ref[...] = y.astype(o_ref.dtype)


def _conv3x3_kernel(x_ref, w_ref, s_ref, b_ref, o_ref, *, act, wpp, L):
    """Fused 3x3/s1/p1 conv (+BN affine +act), kw folded into channels.

    x_ref: (1, (H+2)*wpp, 3*Cin) bf16 — width-im2col'd, spatially padded input,
           width padded to wpp (multiple of 8) and flattened, so the 3 remaining
           height taps are contiguous windows at sublane-aligned offsets
           0 / wpp / 2*wpp.
    w_ref: (3, 3*Cin, tn) bf16 ; s_ref/b_ref: (1, tn) f32
    o_ref: (1, L, tn) with L = H*wpp (padded-width layout; cropped outside).
    """
    a = jnp.dot(x_ref[0, 0:L, :], w_ref[0], preferred_element_type=jnp.float32)
    a = a + jnp.dot(x_ref[0, wpp:wpp + L, :], w_ref[1],
                    preferred_element_type=jnp.float32)
    a = a + jnp.dot(x_ref[0, 2 * wpp:2 * wpp + L, :], w_ref[2],
                    preferred_element_type=jnp.float32)
    y = a * s_ref[...] + b_ref[...]
    if act == "relu":
        y = jnp.maximum(y, 0.0)
    o_ref[0] = y.astype(o_ref.dtype)


def _se_fc_kernel(x_ref, w_ref, b_ref, o_ref, *, act):
    # tiny-M (M = batch) fully-connected layer of the SE block.
    y = jnp.dot(x_ref[...], w_ref[...], preferred_element_type=jnp.float32)
    y = y + b_ref[...]
    if act == "relu":
        y = jnp.maximum(y, 0.0)
    else:
        y = jax.nn.sigmoid(y)
    o_ref[...] = y.astype(o_ref.dtype)


def _avgpool_kernel(x_ref, o_ref, *, inv_hw):
    # AdaptiveAvgPool2d(1), tiled over H*W: accumulate mean contributions into
    # the resident (1,1,C) f32 output block.
    @pl.when(pl.program_id(1) == 0)
    def _():
        o_ref[...] = jnp.zeros_like(o_ref)
    o_ref[...] += jnp.sum(x_ref[...].astype(jnp.float32), axis=1,
                          keepdims=True) * inv_hw


def _gate_add_relu_kernel(x_ref, g_ref, r_ref, o_ref):
    # SE channel gating + residual add + ReLU; gate broadcast from (1,1,C).
    y = x_ref[...].astype(jnp.float32) * g_ref[...] + r_ref[...].astype(jnp.float32)
    o_ref[...] = jnp.maximum(y, 0.0).astype(o_ref.dtype)


def _maxpool_kernel(x_ref, o_ref, *, c):
    """MaxPool2d(3, stride=2, padding=1) from a column-pair-packed block.

    x_ref: (1, H, W//2, 2*C) — lanes [0:C] are even columns (2j), lanes [C:2C]
           odd columns (2j+1).  Column/row shifts handled with an XLU roll and
           slab concatenation; top/left pads injected via masks (one HBM read,
           no padded/strided copies in HBM).
    """
    v = x_ref[0].astype(jnp.float32)                # (H, Wh, 2C)
    xe = v[:, :, :c]                                # col 2j
    xo = v[:, :, c:]                                # col 2j+1
    neg = float(jnp.finfo(jnp.float32).min)
    col = jax.lax.broadcasted_iota(jnp.int32, xo.shape, 1)
    xo_prev = jnp.where(col == 0, neg, pltpu.roll(xo, shift=1, axis=1))
    # per-row window max over cols {2j-1, 2j, 2j+1}
    cm = jnp.maximum(jnp.maximum(xo_prev, xe), xo)  # (H, Wh, C)
    ho = cm.shape[0] // 2
    cm2 = cm.reshape(ho, 2, cm.shape[1], cm.shape[2])
    cme, cmo = cm2[:, 0], cm2[:, 1]                 # rows 2i / 2i+1
    neg_row = jnp.full((1,) + cmo.shape[1:], neg, cmo.dtype)
    cmo_prev = jnp.concatenate([neg_row, cmo[:ho - 1]], axis=0)   # row 2i-1
    out = jnp.maximum(jnp.maximum(cmo_prev, cme), cmo)
    o_ref[0] = out.astype(o_ref.dtype)


# ---------------------------------------------------------------------------
# Pallas-backed ops
# ---------------------------------------------------------------------------
@functools.partial(jax.jit, static_argnames=("act", "out_dtype"))
def matmul_bn_act(x, w, scale, bias, residual=None, *, act="none",
                  out_dtype=jnp.bfloat16):
    """x:(M,K) @ w:(K,N) in bf16 on the MXU, f32 accumulate, fused epilogue."""
    M, K = x.shape
    Kw, N = w.shape
    assert K == Kw
    tm = _pick(M, (512, 256, 128, 64, 32, 16))
    tn = _pick(N, (512, 256, 128))
    tk = _pick(K, (512, 256, 128))
    grid = (M // tm, N // tn, K // tk)

    x = x.astype(jnp.bfloat16)
    w = w.astype(jnp.bfloat16)
    s2 = scale.reshape(1, N).astype(jnp.float32)
    b2 = bias.reshape(1, N).astype(jnp.float32)

    in_specs = [
        pl.BlockSpec((tm, tk), lambda i, j, k: (i, k)),
        pl.BlockSpec((tk, tn), lambda i, j, k: (k, j)),
        pl.BlockSpec((1, tn), lambda i, j, k: (0, j)),
        pl.BlockSpec((1, tn), lambda i, j, k: (0, j)),
    ]
    args = [x, w, s2, b2]
    has_res = residual is not None
    if has_res:
        in_specs.append(pl.BlockSpec((tm, tn), lambda i, j, k: (i, j)))
        # TODO(synk): residual added in bf16 (whole activation path is bf16);
        # PyTorch adds in f32 -> small precision drift on deep residual chains.
        args.append(residual.astype(jnp.bfloat16))

    return pl.pallas_call(
        functools.partial(_matmul_kernel, act=act, has_res=has_res),
        out_shape=jax.ShapeDtypeStruct((M, N), out_dtype),
        grid_spec=pltpu.PrefetchScalarGridSpec(
            num_scalar_prefetch=0,
            grid=grid,
            in_specs=in_specs,
            out_specs=pl.BlockSpec((tm, tn), lambda i, j, k: (i, j)),
            scratch_shapes=[pltpu.VMEM((tm, tn), jnp.float32)]),
        compiler_params=pltpu.CompilerParams(
            dimension_semantics=("parallel", "parallel", "arbitrary")),
    )(*args)


@functools.partial(jax.jit, static_argnames=("act",))
def conv1x1_bn_act(x, w, scale, bias, *, act="relu"):
    N, H, W, C = x.shape
    y = matmul_bn_act(x.reshape(N * H * W, C), w.reshape(-1, w.shape[-1]),
                      scale, bias, act=act)
    return y.reshape(N, H, W, -1)


@jax.jit
def conv1x1_bn_add_relu(x, w, scale, bias, residual):
    # bottleneck tail for non-SE blocks: relu(bn3(conv3(x)) + residual) fused
    # into the matmul epilogue (saves one full read+write of the wide tensor).
    N, H, W, C = x.shape
    y = matmul_bn_act(x.reshape(N * H * W, C), w.reshape(-1, w.shape[-1]),
                      scale, bias, residual.reshape(N * H * W, -1), act="relu")
    return y.reshape(N, H, W, -1)


@functools.partial(jax.jit, static_argnames=("stride",))
def downsample_bn(x, w, scale, bias, *, stride):
    if stride > 1:
        x = x[:, ::stride, ::stride, :]
    N, H, W, C = x.shape
    y = matmul_bn_act(x.reshape(N * H * W, C), w.reshape(-1, w.shape[-1]),
                      scale, bias, act="none")
    return y.reshape(N, H, W, -1)


@functools.partial(jax.jit, static_argnames=("k", "stride", "pad", "act", "out_dtype"))
def conv_im2col_bn_act(x, w, scale, bias, *, k, stride, pad, act="relu",
                       out_dtype=jnp.bfloat16):
    """Fallback conv path (7x7 stem, stride-2 3x3 convs, tiny-spatial 3x3 convs).

    TODO(synk): materializes the im2col patches in HBM; only used where the
    patches tensor is small.
    """
    N, H, W, C = x.shape
    xp = jnp.pad(x, ((0, 0), (pad, pad), (pad, pad), (0, 0)))
    Ho = (H + 2 * pad - k) // stride + 1
    Wo = (W + 2 * pad - k) // stride + 1
    cols = [xp[:, kh:kh + stride * Ho:stride, kw:kw + stride * Wo:stride, :]
            for kh in range(k) for kw in range(k)]
    patches = jnp.concatenate(cols, axis=-1).reshape(N * Ho * Wo, k * k * C)
    y = matmul_bn_act(patches, w, scale, bias, act=act, out_dtype=out_dtype)
    return y.reshape(N, Ho, Wo, -1)


@functools.partial(jax.jit, static_argnames=("act", "out_dtype"))
def _conv3x3_fused(x, w9, scale, bias, *, act, out_dtype):
    """3x3 / stride 1 / pad 1 conv, width taps folded into channels (K=3*Cin)."""
    N, H, W, Cin = x.shape
    Cout = w9.shape[-1]
    wpp = _round_up(W, 8)
    L = H * wpp
    F = (H + 2) * wpp

    xp = jnp.pad(x.astype(jnp.bfloat16), ((0, 0), (1, 1), (1, 1), (0, 0)))
    # partial im2col over kw only: channels become 3*Cin; the 3 remaining height
    # taps are sublane-aligned windows of the flattened (H+2, wpp) image.
    xc = jnp.concatenate([xp[:, :, kw:kw + W, :] for kw in range(3)], axis=-1)
    if wpp > W:
        xc = jnp.pad(xc, ((0, 0), (0, 0), (0, wpp - W), (0, 0)))
    xf = xc.reshape(N, F, 3 * Cin)
    w3 = w9.astype(jnp.bfloat16).reshape(3, 3 * Cin, Cout)

    tn = _pick(Cout, (256, 128))
    out = pl.pallas_call(
        functools.partial(_conv3x3_kernel, act=act, wpp=wpp, L=L),
        out_shape=jax.ShapeDtypeStruct((N, L, Cout), out_dtype),
        grid_spec=pltpu.PrefetchScalarGridSpec(
            num_scalar_prefetch=0,
            grid=(N, Cout // tn),
            in_specs=[
                pl.BlockSpec((1, F, 3 * Cin), lambda n, j: (n, 0, 0)),
                pl.BlockSpec((3, 3 * Cin, tn), lambda n, j: (0, 0, j)),
                pl.BlockSpec((1, tn), lambda n, j: (0, j)),
                pl.BlockSpec((1, tn), lambda n, j: (0, j)),
            ],
            out_specs=pl.BlockSpec((1, L, tn), lambda n, j: (n, 0, j))),
        compiler_params=pltpu.CompilerParams(
            dimension_semantics=("parallel", "parallel")),
    )(xf, w3, scale.reshape(1, -1).astype(jnp.float32),
      bias.reshape(1, -1).astype(jnp.float32))

    out = out.reshape(N, H, wpp, Cout)
    if wpp > W:
        out = out[:, :, :W, :]          # crop pad columns (cheap XLA slice)
    return out


def conv3x3_bn_act(x, w9, scale, bias, *, act="relu", out_dtype=jnp.bfloat16):
    """Dispatch 3x3/s1 convs: fused kernel when W is lane-friendly, else im2col
    (tiny spatial layers, where batch folds into M and patches are small)."""
    N, H, W, C = x.shape
    if W % 8 != 0:
        return conv_im2col_bn_act(x, w9.reshape(-1, w9.shape[-1]), scale, bias,
                                  k=3, stride=1, pad=1, act=act,
                                  out_dtype=out_dtype)
    return _conv3x3_fused(x, w9, scale, bias, act=act, out_dtype=out_dtype)


@jax.jit
def maxpool_3x3_s2_p1(x):
    # TODO(synk): assumes even H and W (true for this network's stem output).
    N, H, W, C = x.shape
    ho, wo = H // 2, W // 2
    xpk = x.reshape(N, H, wo, 2 * C)     # free bitcast: pack column pairs on lanes
    return pl.pallas_call(
        functools.partial(_maxpool_kernel, c=C),
        out_shape=jax.ShapeDtypeStruct((N, ho, wo, C), x.dtype),
        grid_spec=pltpu.PrefetchScalarGridSpec(
            num_scalar_prefetch=0,
            grid=(N,),
            in_specs=[pl.BlockSpec((1, H, wo, 2 * C), lambda n: (n, 0, 0, 0))],
            out_specs=pl.BlockSpec((1, ho, wo, C), lambda n: (n, 0, 0, 0))),
        compiler_params=pltpu.CompilerParams(dimension_semantics=("parallel",)),
    )(xpk)


@functools.partial(jax.jit, static_argnames=("act",))
def se_fc(x, w, b, *, act):
    B, K = x.shape
    _, N = w.shape
    tn = _pick(N, (512, 256, 128))
    return pl.pallas_call(
        functools.partial(_se_fc_kernel, act=act),
        out_shape=jax.ShapeDtypeStruct((B, N), jnp.float32),
        grid_spec=pltpu.PrefetchScalarGridSpec(
            num_scalar_prefetch=0,
            grid=(N // tn,),
            in_specs=[pl.BlockSpec((B, K), lambda j: (0, 0)),
                      pl.BlockSpec((K, tn), lambda j: (0, j)),
                      pl.BlockSpec((1, tn), lambda j: (0, j))],
            out_specs=pl.BlockSpec((B, tn), lambda j: (0, j))),
        compiler_params=pltpu.CompilerParams(dimension_semantics=("parallel",)),
    )(x.astype(jnp.bfloat16), w.astype(jnp.bfloat16),
      b.reshape(1, -1).astype(jnp.float32))


@jax.jit
def se_gate(x, fc1_w, fc1_b, fc2_w, fc2_b):
    """SELayer: avg-pool -> FC -> ReLU -> FC -> Sigmoid. Returns (B,1,C) gate."""
    B, H, W, C = x.shape
    HW = H * W
    t = _pick(HW, (2048, 1024, 512, 256, 128, 64, 32, 16, 8))
    xr = x.reshape(B, HW, C)
    pooled = pl.pallas_call(
        functools.partial(_avgpool_kernel, inv_hw=1.0 / HW),
        out_shape=jax.ShapeDtypeStruct((B, 1, C), jnp.float32),
        grid_spec=pltpu.PrefetchScalarGridSpec(
            num_scalar_prefetch=0,
            grid=(B, HW // t),
            in_specs=[pl.BlockSpec((1, t, C), lambda b, j: (b, j, 0))],
            out_specs=pl.BlockSpec((1, 1, C), lambda b, j: (b, 0, 0))),
        compiler_params=pltpu.CompilerParams(
            dimension_semantics=("parallel", "arbitrary")),
    )(xr)
    y = pooled.reshape(B, C)
    # TODO(synk): the two SE FCs stay as separate tiny Pallas calls (merging both
    # 2048x2048 weights into one call would not fit comfortably in scoped VMEM).
    y = se_fc(y, fc1_w, fc1_b, act="relu")
    y = se_fc(y, fc2_w, fc2_b, act="sigmoid")
    return y.reshape(B, 1, C)


@jax.jit
def gate_add_relu(x, gate, residual):
    """out = relu(x * gate[:, None, None, :] + residual) (SE blocks only)."""
    B, H, W, C = x.shape
    HW = H * W
    t = _pick(HW, (2048, 1024, 512, 256, 128, 64, 32, 16, 8))
    xr = x.reshape(B, HW, C)
    rr = residual.reshape(B, HW, C)
    out = pl.pallas_call(
        _gate_add_relu_kernel,
        out_shape=jax.ShapeDtypeStruct((B, HW, C), jnp.bfloat16),
        grid_spec=pltpu.PrefetchScalarGridSpec(
            num_scalar_prefetch=0,
            grid=(B, HW // t),
            in_specs=[pl.BlockSpec((1, t, C), lambda b, j: (b, j, 0)),
                      pl.BlockSpec((1, 1, C), lambda b, j: (b, 0, 0)),
                      pl.BlockSpec((1, t, C), lambda b, j: (b, j, 0))],
            out_specs=pl.BlockSpec((1, t, C), lambda b, j: (b, j, 0))),
        compiler_params=pltpu.CompilerParams(
            dimension_semantics=("parallel", "parallel")),
    )(xr, gate, rr)
    return out.reshape(B, H, W, C)


def pixel_shuffle_nhwc(x, r):
    # PyTorch nn.PixelShuffle(r) semantics, expressed in NHWC (pure data movement).
    N, H, W, C = x.shape
    c = C // (r * r)
    x = x.reshape(N, H, W, c, r, r)
    x = jnp.transpose(x, (0, 1, 4, 2, 5, 3))
    return x.reshape(N, H * r, W * r, c)


# ---------------------------------------------------------------------------
# Deterministic parameter construction (synthetic; mirrors module shapes)
# Weights stored pre-cast to bf16 in the layouts the kernels want.
# ---------------------------------------------------------------------------
def _conv_bn_params(key, cin, cout, k):
    kw, kg, kb, km, kv = jax.random.split(key, 5)
    fan_in = cin * k * k
    w = jax.random.normal(kw, (k * k, cin, cout), jnp.float32) / math.sqrt(fan_in)
    gamma = 1.0 + 0.1 * jax.random.normal(kg, (cout,), jnp.float32)
    beta = 0.05 * jax.random.normal(kb, (cout,), jnp.float32)
    mean = 0.05 * jax.random.normal(km, (cout,), jnp.float32)
    var = 1.0 + 0.1 * jax.random.uniform(kv, (cout,), jnp.float32)
    scale = gamma / jnp.sqrt(var + 1e-5)          # eval-mode BN folded into affine
    bias = beta - mean * scale
    return {"w": w.astype(jnp.bfloat16), "scale": scale, "bias": bias}


def _conv_bias_params(key, cin, cout, k):
    kw, kb = jax.random.split(key)
    fan_in = cin * k * k
    w = jax.random.normal(kw, (k * k, cin, cout), jnp.float32) / math.sqrt(fan_in)
    b = 0.01 * jax.random.normal(kb, (cout,), jnp.float32)
    return {"w": w.astype(jnp.bfloat16),
            "scale": jnp.ones((cout,), jnp.float32), "bias": b}


def _se_params(key, channel, reduction=SE_REDUCTION):
    k1, k2, k3, k4 = jax.random.split(key, 4)
    hidden = channel // reduction
    return {
        "fc1_w": (jax.random.normal(k1, (channel, hidden), jnp.float32)
                  / math.sqrt(channel)).astype(jnp.bfloat16),
        "fc1_b": 0.01 * jax.random.normal(k2, (hidden,), jnp.float32),
        "fc2_w": (jax.random.normal(k3, (hidden, channel), jnp.float32)
                  / math.sqrt(hidden)).astype(jnp.bfloat16),
        "fc2_b": 0.01 * jax.random.normal(k4, (channel,), jnp.float32),
    }


def init_fastpose_se(key, n_classes):
    keys = iter(jax.random.split(key, 512))
    params = {"conv1": _conv_bn_params(next(keys), 3, 64, 7)}
    layers = []
    inplanes = 64
    for planes, nblocks, stride in RESNET101_LAYERS:
        layer = []
        for bi in range(nblocks):
            s = stride if bi == 0 else 1
            has_down = (bi == 0) and (s != 1 or inplanes != planes * 4)
            # AlphaPose SE_Resnet passes reduction=True only to the first
            # (downsampling) block of each stage, so has_se == has_down.
            has_se = has_down
            bp = {
                "stride": s, "has_down": has_down, "has_se": has_se,
                "conv1": _conv_bn_params(next(keys), inplanes, planes, 1),
                "conv2": _conv_bn_params(next(keys), planes, planes, 3),
                "conv3": _conv_bn_params(next(keys), planes, planes * 4, 1),
            }
            if has_down:
                bp["down"] = _conv_bn_params(next(keys), inplanes, planes * 4, 1)
            if has_se:
                bp["se"] = _se_params(next(keys), planes * 4)
            layer.append(bp)
            inplanes = planes * 4
        layers.append(layer)
    params["layers"] = layers
    params["duc1"] = _conv_bn_params(next(keys), 512, 1024, 3)   # DUC(512, 1024)
    params["duc2"] = _conv_bn_params(next(keys), 256, 512, 3)    # DUC(256, 512)
    params["conv_out"] = _conv_bias_params(next(keys), 128, n_classes, 3)
    return params


# ---------------------------------------------------------------------------
# Forward pass
# ---------------------------------------------------------------------------
def bottleneck_forward(x, bp):
    s = bp["stride"]
    c1, c2, c3 = bp["conv1"], bp["conv2"], bp["conv3"]
    out = conv1x1_bn_act(x, c1["w"], c1["scale"], c1["bias"], act="relu")
    if s == 1:
        out = conv3x3_bn_act(out, c2["w"], c2["scale"], c2["bias"], act="relu")
    else:
        # TODO(synk): the 3 stride-2 3x3 convs still use HBM im2col patches
        # (small tensors); the fused kernel only covers stride 1.
        out = conv_im2col_bn_act(out, c2["w"].reshape(-1, c2["w"].shape[-1]),
                                 c2["scale"], c2["bias"],
                                 k=3, stride=s, pad=1, act="relu")
    if bp["has_down"]:
        d = bp["down"]
        residual = downsample_bn(x, d["w"], d["scale"], d["bias"], stride=s)
    else:
        residual = x

    if bp["has_se"]:
        out = conv1x1_bn_act(out, c3["w"], c3["scale"], c3["bias"], act="none")
        se = bp["se"]
        gate = se_gate(out, se["fc1_w"], se["fc1_b"], se["fc2_w"], se["fc2_b"])
        out = gate_add_relu(out, gate, residual)
    else:
        out = conv1x1_bn_add_relu(out, c3["w"], c3["scale"], c3["bias"], residual)
    return out


def fastpose_se_forward(x_nchw, params):
    # NCHW in (PyTorch convention) -> NHWC bf16 for the kernels -> NCHW f32 out.
    x = jnp.transpose(x_nchw, (0, 2, 3, 1)).astype(jnp.bfloat16)

    # SEResnet('resnet101') stem
    p = params["conv1"]
    x = conv_im2col_bn_act(x, p["w"].reshape(-1, p["w"].shape[-1]),
                           p["scale"], p["bias"], k=7, stride=2, pad=3, act="relu")
    x = maxpool_3x3_s2_p1(x)

    # layer1..layer4 (3, 4, 23, 3 SE bottlenecks)
    for layer in params["layers"]:
        for bp in layer:
            x = bottleneck_forward(x, bp)

    # head: PixelShuffle(2) -> DUC(512,1024) -> DUC(256,512) -> conv_out
    x = pixel_shuffle_nhwc(x, 2)
    for name in ("duc1", "duc2"):
        d = params[name]
        x = conv3x3_bn_act(x, d["w"], d["scale"], d["bias"], act="relu")
        x = pixel_shuffle_nhwc(x, 2)

    # conv_out: zero-pad output channels to 128 (lane-dense stores), crop after.
    co = params["conv_out"]
    ncls = co["w"].shape[-1]
    cpad = _round_up(max(ncls, 128), 128)
    w_pad = jnp.pad(co["w"], ((0, 0), (0, 0), (0, cpad - ncls)))
    s_pad = jnp.pad(co["scale"], (0, cpad - ncls), constant_values=1.0)
    b_pad = jnp.pad(co["bias"], (0, cpad - ncls))
    x = conv3x3_bn_act(x, w_pad, s_pad, b_pad, act="none", out_dtype=jnp.float32)
    x = x[..., :ncls]

    return jnp.transpose(x, (0, 3, 1, 2))


if __name__ == "__main__":
    key = jax.random.PRNGKey(0)
    pkey, xkey = jax.random.split(key)

    params = init_fastpose_se(pkey, NUM_CLASSES)
    # Small input consistent with the module: NCHW image batch.
    x = jax.random.normal(xkey, (2, 3, 64, 64), jnp.float32)

    out = fastpose_se_forward(x, params)
    out = jax.block_until_ready(out)

    assert out.shape == (2, NUM_CLASSES, 16, 16), out.shape
    assert bool(jnp.isfinite(out).all())
    print("KERNEL_OK")
</pallas_src>

<mosaic_0001>
module attributes {stable_mosaic.version = 11 : i64} {
  func.func @_matmul_kernel(%arg0: i32, %arg1: i32, %arg2: i32, %arg3: memref<512x147xbf16, #tpu.memory_space<vmem>>, %arg4: memref<147x64xbf16, #tpu.memory_space<vmem>>, %arg5: memref<1x64xf32, #tpu.memory_space<vmem>>, %arg6: memref<1x64xf32, #tpu.memory_space<vmem>>, %arg7: memref<512x64xbf16, #tpu.memory_space<vmem>>, %arg8: memref<512x64xf32, #tpu.memory_space<vmem>>) attributes {dimension_semantics = [#tpu.dimension_semantics<parallel>, #tpu.dimension_semantics<parallel>, #tpu.dimension_semantics<arbitrary>], iteration_bounds = array<i64: 4, 1, 1>, scalar_prefetch = 0 : i64, scratch_operands = 1 : i64, tpu.core_type = #tpu.core_type<tc>, window_params = [{transform_indices = @transform_0, window_bounds = array<i64: 512, 147>}, {transform_indices = @transform_1, window_bounds = array<i64: 147, 64>}, {transform_indices = @transform_2, window_bounds = array<i64: 1, 64>}, {transform_indices = @transform_3, window_bounds = array<i64: 1, 64>}, {transform_indices = @transform_4, window_bounds = array<i64: 512, 64>}]} {
    %c0_i32 = arith.constant 0 : i32
    %0 = arith.cmpi eq, %arg2, %c0_i32 : i32
    %1 = arith.extui %0 : i1 to i32
    %c0_i32_0 = arith.constant 0 : i32
    %2 = arith.cmpi ne, %1, %c0_i32_0 : i32
    scf.if %2 {
      %cst_10 = arith.constant 0.000000e+00 : f32
      %12 = vector.broadcast %cst_10 : f32 to vector<512x64xf32>
      %c0_11 = arith.constant 0 : index
      %c0_12 = arith.constant 0 : index
      %13 = vector.load %arg8[%c0_11, %c0_12] : memref<512x64xf32, #tpu.memory_space<vmem>>, vector<512x64xf32>
      tpu.vector_store %arg8[%c0_11, %c0_12], %12 {strides = array<i32>} : memref<512x64xf32, #tpu.memory_space<vmem>>, vector<512x64xf32>,
    } else {
    }
    %c0 = arith.constant 0 : index
    %c0_1 = arith.constant 0 : index
    %3 = vector.load %arg8[%c0, %c0_1] : memref<512x64xf32, #tpu.memory_space<vmem>>, vector<512x64xf32>
    %c0_2 = arith.constant 0 : index
    %c0_3 = arith.constant 0 : index
    %4 = vector.load %arg3[%c0_2, %c0_3] : memref<512x147xbf16, #tpu.memory_space<vmem>>, vector<512x147xbf16>
    %c0_4 = arith.constant 0 : index
    %c0_5 = arith.constant 0 : index
    %5 = vector.load %arg4[%c0_4, %c0_5] : memref<147x64xbf16, #tpu.memory_space<vmem>>, vector<147x64xbf16>
    %cst = arith.constant dense<0.000000e+00> : vector<512x64xf32>
    %6 = tpu.matmul %4, %5, %cst {dimension_numbers = #tpu.dot_dimension_numbers<[1], [0], [0], [1], [0, 0, 1, 1], [], []>} : vector<512x147xbf16>, vector<147x64xbf16>, vector<512x64xf32> -> vector<512x64xf32>
    %7 = arith.addf %3, %6 : vector<512x64xf32>
    %c0_6 = arith.constant 0 : index
    %c0_7 = arith.constant 0 : index
    %8 = vector.load %arg8[%c0_6, %c0_7] : memref<512x64xf32, #tpu.memory_space<vmem>>, vector<512x64xf32>
    tpu.vector_store %arg8[%c0_6, %c0_7], %7 {strides = array<i32>} : memref<512x64xf32, #tpu.memory_space<vmem>>, vector<512x64xf32>,
    %c0_i32_8 = arith.constant 0 : i32
    %9 = arith.cmpi eq, %arg2, %c0_i32_8 : i32
    %10 = arith.extui %9 : i1 to i32
    %c0_i32_9 = arith.constant 0 : i32
    %11 = arith.cmpi ne, %10, %c0_i32_9 : i32
    scf.if %11 {
      %c0_10 = arith.constant 0 : index
      %c0_11 = arith.constant 0 : index
      %12 = vector.load %arg8[%c0_10, %c0_11] : memref<512x64xf32, #tpu.memory_space<vmem>>, vector<512x64xf32>
      %c0_12 = arith.constant 0 : index
      %c0_13 = arith.constant 0 : index
      %13 = vector.load %arg5[%c0_12, %c0_13] : memref<1x64xf32, #tpu.memory_space<vmem>>, vector<1x64xf32>
      %14 = vector.broadcast %13 : vector<1x64xf32> to vector<512x64xf32>
      %15 = arith.mulf %12, %14 : vector<512x64xf32>
      %c0_14 = arith.constant 0 : index
      %c0_15 = arith.constant 0 : index
      %16 = vector.load %arg6[%c0_14, %c0_15] : memref<1x64xf32, #tpu.memory_space<vmem>>, vector<1x64xf32>
      %17 = vector.broadcast %16 : vector<1x64xf32> to vector<512x64xf32>
      %18 = arith.addf %15, %17 : vector<512x64xf32>
      %cst_16 = arith.constant 0.000000e+00 : f32
      %19 = vector.broadcast %cst_16 : f32 to vector<512x64xf32>
      %20 = arith.maximumf %18, %19 : vector<512x64xf32>
      %21 = arith.truncf %20 : vector<512x64xf32> to vector<512x64xbf16>
      %c0_17 = arith.constant 0 : index
      %c0_18 = arith.constant 0 : index
      %22 = vector.load %arg7[%c0_17, %c0_18] : memref<512x64xbf16, #tpu.memory_space<vmem>>, vector<512x64xbf16>
      tpu.vector_store %arg7[%c0_17, %c0_18], %21 {strides = array<i32>} : memref<512x64xbf16, #tpu.memory_space<vmem>>, vector<512x64xbf16>,
    } else {
    }
    return
  }
  func.func @transform_0(%arg0: i32, %arg1: i32, %arg2: i32) -> (i32, i32) {
    %c0_i32 = arith.constant 0 : i32
    return %arg0, %arg2 : i32, i32
  }
  func.func @transform_1(%arg0: i32, %arg1: i32, %arg2: i32) -> (i32, i32) {
    %c0_i32 = arith.constant 0 : i32
    return %arg2, %arg1 : i32, i32
  }
  func.func @transform_2(%arg0: i32, %arg1: i32, %arg2: i32) -> (i32, i32) {
    %c0_i32 = arith.constant 0 : i32
    %c0_i32_0 = arith.constant 0 : i32
    return %c0_i32, %arg1 : i32, i32
  }
  func.func @transform_3(%arg0: i32, %arg1: i32, %arg2: i32) -> (i32, i32) {
    %c0_i32 = arith.constant 0 : i32
    %c0_i32_0 = arith.constant 0 : i32
    return %c0_i32, %arg1 : i32, i32
  }
  func.func @transform_4(%arg0: i32, %arg1: i32, %arg2: i32) -> (i32, i32) {
    %c0_i32 = arith.constant 0 : i32
    return %arg0, %arg1 : i32, i32
  }
}

</mosaic_0001>

<llo_original>
// kernel: matmul_bn_act.1
$region0: #{matmul_bn_act.1}
  #allocation0 [shape = 'u32[]', space=smem, size = 0x4, offset = 0x4, fixed_abs, tag = 'smem constant byte address 0x4 - core index']
  #allocation1 [shape = 'u32[144,128]{1,0:T(1,128)}', space=vmem, size = 0x12000, scoped, tag = 'internal scratch']
  #allocation2 [shape = 'f32[512,64]{1,0:T(8,128)}', space=vmem, size = 0x40000, scoped, tag = 'scratch operand']
  %s0 = inlined_call_operand.vmem [shape: bf16[2048,147], index: 0, kind: input, shape index: {}]
  %s1 = inlined_call_operand.vmem [shape: bf16[147,64], index: 1, kind: input, shape index: {}]
  %s2 = inlined_call_operand.vmem [shape: f32[1,64], index: 2, kind: input, shape index: {}]
  %s3 = inlined_call_operand.vmem [shape: f32[1,64], index: 3, kind: input, shape index: {}]
  %s4 = inlined_call_operand.vmem [shape: bf16[2048,64], index: 4, kind: output, shape index: {}]
  %s5 = sld [smem:[#allocation0]]
  $region57: #{matmul_bn_act.1} parent=0
    _
  %s7 = ssub.s32 1, %s5
  %s8 = scalar_select 0, %s7, %s5
  loop: start=0, step=1, limit=6
  $region2: #{matmul_bn_act.1} parent=0 // loop_pre_header
    _
  $region3: #{matmul_bn_act.1} parent=0 // loop_header
    %s10 = sphi 0, %s14
    %p11 = scmp.ge.s32.totalorder %s10, 6
    %s17 = sphi 0, %s36
    %s18 = sphi 0, %s32
    %s19 = sphi 0, %s28
    %s20 = sphi 0, %s17
    %s21 = sphi 0, %s18
    %s22 = sphi 0, %s19
    %s23 = sphi 0, %s20
    %s24 = sphi 0, %s21
    %s25 = sphi 0, %s22
    %s41 = sphi 0, %s43
    %s44 = sphi 0, %s41
    %s45 = sphi 0, %s44
    %s61 = sphi 0, %s45
    %s69 = sphi 0, %s71
    %s72 = sphi 0, %s69
    %s73 = sphi 0, %s72
    %s89 = sphi 0, %s73
    %s95 = sphi 0, %s97
    %s98 = sphi 0, %s95
    %s99 = sphi 0, %s98
    %s115 = sphi 0, %s99
    %s121 = sphi 0, %s123
    %s124 = sphi 0, %s121
    %s125 = sphi 0, %s124
    %s141 = sphi 0, %s125
    %s149 = sphi 0, %s151
    %s152 = sphi 0, %s149
    %s153 = sphi 0, %s152
    %s169 = sphi 0, %s153
  $region4: #{matmul_bn_act.1} parent=0 // loop_header_branch
    %13 = sbr.rel (%p11) target = $region8
  $region5: #{matmul_bn_act.1} parent=0 // loop_body
    %s15 = ssub.s32 %s10, 1
    %s16 = ssub.s32 %s10, 2
    %s26 = sadd.s32 1, %s19
    %p27 = scmp.ge.s32.totalorder %s26, 1
    %s28 = scalar_select %p27, 0, %s26
    %s29 = sadd.s32 1, %s18
    %s30 = scalar_select %p27, %s29, %s18
    %p31 = scmp.ge.s32.totalorder %s30, 1
    %s32 = scalar_select %p31, 0, %s30
    %s33 = sadd.s32 1, %s17
    %s34 = scalar_select %p31, %s33, %s17
    %p35 = scmp.ge.s32.totalorder %s34, 4
    %s36 = scalar_select %p35, 0, %s34
    %s37 = ssub.s32 %s17, %s36
    %s38 = ssub.s32 %s19, %s28
    %s39 = sor.u32 %s37, %s38
    %p40 = scmp.eq.s32.totalorder %s39, 0
    %s42 = sadd.s32 %s41, 1
    %s43 = scalar_select %p40, %s41, %s42
    %p46 = pneg %p40
    %p47 = scmp.eq.s32.totalorder %s10, 3
    %p48 = por %p46, %p47
    %p49 = scmp.ne.s32.totalorder %s41, %s44
    %p50 = scmp.eq.s32.totalorder %s10, 0
    %p51 = por %p49, %p50
    %p52 = scmp.ne.s32.totalorder %s41, %s44
    %p53 = scmp.eq.s32.totalorder %s15, 3
    %p54 = por %p52, %p53
    %p55 = scmp.ne.s32.totalorder %s44, %s45
    %p56 = scmp.eq.s32.totalorder %s15, 0
    %p57 = por %p55, %p56
    %p58 = scmp.ne.s32.totalorder %s44, %s45
    %p59 = scmp.eq.s32.totalorder %s16, 3
    %p60 = por %p58, %p59
    %p62 = scmp.ne.s32.totalorder %s45, %s61
    %p63 = scmp.eq.s32.totalorder %s16, 0
    %p64 = por %p62, %p63
    %s65 = ssub.s32 %s19, %s28
    %s66 = ssub.s32 %s18, %s32
    %s67 = sor.u32 %s65, %s66
    %p68 = scmp.eq.s32.totalorder %s67, 0
    %s70 = sadd.s32 %s69, 1
    %s71 = scalar_select %p68, %s69, %s70
    %p74 = pneg %p68
    %p75 = scmp.eq.s32.totalorder %s10, 3
    %p76 = por %p74, %p75
    %p77 = scmp.ne.s32.totalorder %s69, %s72
    %p78 = scmp.eq.s32.totalorder %s10, 0
    %p79 = por %p77, %p78
    %p80 = scmp.ne.s32.totalorder %s69, %s72
    %p81 = scmp.eq.s32.totalorder %s15, 3
    %p82 = por %p80, %p81
    %p83 = scmp.ne.s32.totalorder %s72, %s73
    %p84 = scmp.eq.s32.totalorder %s15, 0
    %p85 = por %p83, %p84
    %p86 = scmp.ne.s32.totalorder %s72, %s73
    %p87 = scmp.eq.s32.totalorder %s16, 3
    %p88 = por %p86, %p87
    %p90 = scmp.ne.s32.totalorder %s73, %s89
    %p91 = scmp.eq.s32.totalorder %s16, 0
    %p92 = por %p90, %p91
    %s93 = ssub.s32 %s18, %s32
    %p94 = scmp.eq.s32.totalorder %s93, 0
    %s96 = sadd.s32 %s95, 1
    %s97 = scalar_select %p94, %s95, %s96
    %p100 = pneg %p94
    %p101 = scmp.eq.s32.totalorder %s10, 3
    %p102 = por %p100, %p101
    %p103 = scmp.ne.s32.totalorder %s95, %s98
    %p104 = scmp.eq.s32.totalorder %s10, 0
    %p105 = por %p103, %p104
    %p106 = scmp.ne.s32.totalorder %s95, %s98
    %p107 = scmp.eq.s32.totalorder %s15, 3
    %p108 = por %p106, %p107
    %p109 = scmp.ne.s32.totalorder %s98, %s99
    %p110 = scmp.eq.s32.totalorder %s15, 0
    %p111 = por %p109, %p110
    %p112 = scmp.ne.s32.totalorder %s98, %s99
    %p113 = scmp.eq.s32.totalorder %s16, 3
    %p114 = por %p112, %p113
    %p116 = scmp.ne.s32.totalorder %s99, %s115
    %p117 = scmp.eq.s32.totalorder %s16, 0
    %p118 = por %p116, %p117
    %s119 = ssub.s32 %s18, %s32
    %p120 = scmp.eq.s32.totalorder %s119, 0
    %s122 = sadd.s32 %s121, 1
    %s123 = scalar_select %p120, %s121, %s122
    %p126 = pneg %p120
    %p127 = scmp.eq.s32.totalorder %s10, 3
    %p128 = por %p126, %p127
    %p129 = scmp.ne.s32.totalorder %s121, %s124
    %p130 = scmp.eq.s32.totalorder %s10, 0
    %p131 = por %p129, %p130
    %p132 = scmp.ne.s32.totalorder %s121, %s124
    %p133 = scmp.eq.s32.totalorder %s15, 3
    %p134 = por %p132, %p133
    %p135 = scmp.ne.s32.totalorder %s124, %s125
    %p136 = scmp.eq.s32.totalorder %s15, 0
    %p137 = por %p135, %p136
    %p138 = scmp.ne.s32.totalorder %s124, %s125
    %p139 = scmp.eq.s32.totalorder %s16, 3
    %p140 = por %p138, %p139
    %p142 = scmp.ne.s32.totalorder %s125, %s141
    %p143 = scmp.eq.s32.totalorder %s16, 0
    %p144 = por %p142, %p143
    %s145 = ssub.s32 %s17, %s36
    %s146 = ssub.s32 %s18, %s32
    %s147 = sor.u32 %s145, %s146
    %p148 = scmp.eq.s32.totalorder %s147, 0
    %s150 = sadd.s32 %s149, 1
    %s151 = scalar_select %p148, %s149, %s150
    %p154 = pneg %p148
    %p155 = scmp.eq.s32.totalorder %s10, 3
    %p156 = por %p154, %p155
    %p157 = scmp.ne.s32.totalorder %s149, %s152
    %p158 = scmp.eq.s32.totalorder %s10, 0
    %p159 = por %p157, %p158
    %p160 = scmp.ne.s32.totalorder %s149, %s152
    %p161 = scmp.eq.s32.totalorder %s15, 3
    %p162 = por %p160, %p161
    %p163 = scmp.ne.s32.totalorder %s152, %s153
    %p164 = scmp.eq.s32.totalorder %s15, 0
    %p165 = por %p163, %p164
    %p166 = scmp.ne.s32.totalorder %s152, %s153
    %p167 = scmp.eq.s32.totalorder %s16, 3
    %p168 = por %p166, %p167
    %p170 = scmp.ne.s32.totalorder %s153, %s169
    %p171 = scmp.eq.s32.totalorder %s16, 0
    %p172 = por %p170, %p171
    %p173 = scmp.le.s32.totalorder 1, %s10
    %p174 = scmp.lt.s32.totalorder %s10, 5
    %p175 = pnand %p173, %p174
    %p176 = pneg %p175
    // Predicated region
    $region9: #{matmul_bn_act.1} parent=5 // pred_check
      _
    $region10: #{matmul_bn_act.1} parent=5 // pred_check_branch
      %178 = sbr.rel (%p175) target = $region12
    $region11: #{matmul_bn_act.1} parent=5 // pred_region
      %s179 = ssub.s32 %s10, 1
      // Predicated region
      $region13: #{matmul_bn_act.1} parent=11 // pred_check
        %p180 = pneg %p85
      $region14: #{matmul_bn_act.1} parent=11 // pred_check_branch
        %182 = sbr.rel (%p180) target = $region16
      $region15: #{matmul_bn_act.1} parent=11 // pred_region
        %s183 = smul.u32 19, %s22
        %p184 = scmp.lt.s32.totalorder %s183, 18
        %s185 = scalar_select %p184, %s183, 18
        %p186 = scmp.lt.s32.totalorder %s21, 0
        %s187 = scalar_select %p186, %s21, 0
        %s188 = sadd.s32 %s187, %s185
        %s189 = smul.addr %s188, 4
        %s190 = scalar_lea.vmem %s1, %s189
        %s191 = smul.u32 19, %s22
      $region16: #{matmul_bn_act.1} parent=11 // pred_fallthru
        _
      // Predicated region
      $region17: #{matmul_bn_act.1} parent=11 // pred_check
        %p192 = pneg %p111
      $region18: #{matmul_bn_act.1} parent=11 // pred_check_branch
        %194 = sbr.rel (%p192) target = $region20
      $region19: #{matmul_bn_act.1} parent=11 // pred_region
        %p195 = scmp.lt.s32.totalorder %s21, 0
        %s196 = scalar_select %p195, %s21, 0
        %s197 = scalar_lea.vmem %s2, %s196
      $region20: #{matmul_bn_act.1} parent=11 // pred_fallthru
        _
      // Predicated region
      $region21: #{matmul_bn_act.1} parent=11 // pred_check
        %p198 = pneg %p137
      $region22: #{matmul_bn_act.1} parent=11 // pred_check_branch
        %200 = sbr.rel (%p198) target = $region24
      $region23: #{matmul_bn_act.1} parent=11 // pred_region
        %p201 = scmp.lt.s32.totalorder %s21, 0
        %s202 = scalar_select %p201, %s21, 0
        %s203 = scalar_lea.vmem %s3, %s202
      $region24: #{matmul_bn_act.1} parent=11 // pred_fallthru
        _
    $region12: #{matmul_bn_act.1} parent=5 // pred_fallthru
      _
    %p204 = scmp.lt.s32.totalorder %s10, 4
    // Predicated region
    $region25: #{matmul_bn_act.1} parent=5 // pred_check
      %p205 = pneg %p204
    $region26: #{matmul_bn_act.1} parent=5 // pred_check_branch
      %207 = sbr.rel (%p205) target = $region28
    $region27: #{matmul_bn_act.1} parent=5 // pred_region
      // Predicated region
      $region29: #{matmul_bn_act.1} parent=27 // pred_check
        %p208 = pneg %p51
      $region30: #{matmul_bn_act.1} parent=27 // pred_check_branch
        %210 = sbr.rel (%p208) target = $region32
      $region31: #{matmul_bn_act.1} parent=27 // pred_region
        %s211 = smul.u32 64, %s17
        %s212 = smul.u32 2, %s19
        %p213 = scmp.lt.s32.totalorder %s211, 255
        %s214 = scalar_select %p213, %s211, 255
        %p215 = scmp.lt.s32.totalorder %s212, 1
        %s216 = scalar_select %p215, %s212, 1
        %s217 = smul.addr %s214, 2
        %s218 = sadd.s32 %s216, %s217
        %s219 = smul.addr %s218, 4
        %s220 = scalar_lea.vmem %s0, %s219
        %s221 = smul.u32 64, %s17
        %s222 = smul.u32 2, %s19
      $region32: #{matmul_bn_act.1} parent=27 // pred_fallthru
        _
    $region28: #{matmul_bn_act.1} parent=5 // pred_fallthru
      _
    %p223 = scmp.le.s32.totalorder 1, %s10
    %p224 = scmp.lt.s32.totalorder %s10, 5
    %p225 = pnand %p223, %p224
    %p226 = pneg %p225
    // Predicated region
    $region33: #{matmul_bn_act.1} parent=5 // pred_check
      _
    $region34: #{matmul_bn_act.1} parent=5 // pred_check_branch
      %228 = sbr.rel (%p225) target = $region36
    $region35: #{matmul_bn_act.1} parent=5 // pred_region
      %s229 = ssub.s32 %s10, 1
      %s230 = smul.u32 64, %s20
      %s231 = smul.u32 2, %s22
      %p232 = scmp.lt.s32.totalorder %s230, 255
      %s233 = scalar_select %p232, %s230, 255
      %p234 = scmp.lt.s32.totalorder %s231, 1
      %s235 = scalar_select %p234, %s231, 1
      %s236 = smul.addr %s233, 2
      %s237 = sadd.s32 %s235, %s236
      %s238 = smul.addr %s237, 4
      %s239 = scalar_lea.vmem %s0, %s238
      %p240 = pneg %p57
      %p241 = pneg %p54
      %s242 = smul.u32 19, %s22
      %p243 = scmp.lt.s32.totalorder %s242, 18
      %s244 = scalar_select %p243, %s242, 18
      %p245 = scmp.lt.s32.totalorder %s21, 0
      %s246 = scalar_select %p245, %s21, 0
      %s247 = sadd.s32 %s246, %s244
      %s248 = smul.addr %s247, 4
      %s249 = scalar_lea.vmem %s1, %s248
      %p250 = pneg %p85
      %p251 = pneg %p82
      %p252 = scmp.lt.s32.totalorder %s21, 0
      %s253 = scalar_select %p252, %s21, 0
      %s254 = scalar_lea.vmem %s2, %s253
      %p255 = pneg %p111
      %p256 = pneg %p108
      %p257 = scmp.lt.s32.totalorder %s21, 0
      %s258 = scalar_select %p257, %s21, 0
      %s259 = scalar_lea.vmem %s3, %s258
      %p260 = pneg %p137
      %p261 = pneg %p134
      %p262 = pneg %p165
      %p263 = pneg %p162
      %s264 = smul.u32 64, %s20
      %p265 = scmp.lt.s32.totalorder %s264, 255
      %s266 = scalar_select %p265, %s264, 255
      %p267 = scmp.lt.s32.totalorder %s21, 0
      %s268 = scalar_select %p267, %s21, 0
      %s269 = sadd.s32 %s268, %s266
      %s270 = smul.addr %s269, 4
      %s271 = scalar_lea.vmem %s4, %s270
      %s272 = smul.u32 64, %s20
      %s273 = smul.u32 2, %s22
      %p274 = scmp.lt.s32.totalorder %s272, 255
      %s275 = scalar_select %p274, %s272, 255
      %p276 = scmp.lt.s32.totalorder %s273, 1
      %s277 = scalar_select %p276, %s273, 1
      %s278 = smul.addr %s275, 2
      %s279 = sadd.s32 %s277, %s278
      %s280 = smul.addr %s279, 4
      %s281 = scalar_lea.vmem %s0, %s280
      %s282 = smul.u32 64, %s20
      %s283 = smul.u32 2, %s22
      %s284 = smul.u32 19, %s22
      %p285 = scmp.lt.s32.totalorder %s284, 18
      %s286 = scalar_select %p285, %s284, 18
      %p287 = scmp.lt.s32.totalorder %s21, 0
      %s288 = scalar_select %p287, %s21, 0
      %s289 = sadd.s32 %s288, %s286
      %s290 = smul.addr %s289, 4
      %s291 = scalar_lea.vmem %s1, %s290
      %s292 = smul.u32 19, %s22
      %p293 = scmp.lt.s32.totalorder %s21, 0
      %s294 = scalar_select %p293, %s21, 0
      %s295 = scalar_lea.vmem %s2, %s294
      %p296 = scmp.lt.s32.totalorder %s21, 0
      %s297 = scalar_select %p296, %s21, 0
      %s298 = scalar_lea.vmem %s3, %s297
      %s299 = smul.u32 64, %s20
      %p300 = scmp.lt.s32.totalorder %s299, 255
      %s301 = scalar_select %p300, %s299, 255
      %p302 = scmp.lt.s32.totalorder %s21, 0
      %s303 = scalar_select %p302, %s21, 0
      %s304 = sadd.s32 %s303, %s301
      %s305 = smul.addr %s304, 4
      %s306 = scalar_lea.vmem %s4, %s305
      %s307 = smul.u32 64, %s20
      %p309 = scmp.eq.s32.totalorder %s22, 0
      // Predicated region
      $region37: #{matmul_bn_act.1} parent=35 // pred_check
        %p310 = pneg %p309
      $region38: #{matmul_bn_act.1} parent=35 // pred_check_branch
        %312 = sbr.rel (%p310) target = $region40
      $region39: #{matmul_bn_act.1} parent=35 // pred_region
        %vm313 = vcmask 523264
        %314 = vst.msk [vmem:[#allocation2] sm:$0xff] %vm313, 0.0
        %315 = vst.msk [vmem:[#allocation2 + $0x8] sm:$0xff] %vm313, 0.0
        %316 = vst.msk [vmem:[#allocation2 + $0x10] sm:$0xff] %vm313, 0.0
        %317 = vst.msk [vmem:[#allocation2 + $0x18] sm:$0xff] %vm313, 0.0
        %318 = vst.msk [vmem:[#allocation2 + $0x20] sm:$0xff] %vm313, 0.0
        %319 = vst.msk [vmem:[#allocation2 + $0x28] sm:$0xff] %vm313, 0.0
        %320 = vst.msk [vmem:[#allocation2 + $0x30] sm:$0xff] %vm313, 0.0
        %321 = vst.msk [vmem:[#allocation2 + $0x38] sm:$0xff] %vm313, 0.0
        %322 = vst.msk [vmem:[#allocation2 + $0x40] sm:$0xff] %vm313, 0.0
        %323 = vst.msk [vmem:[#allocation2 + $0x48] sm:$0xff] %vm313, 0.0
        %324 = vst.msk [vmem:[#allocation2 + $0x50] sm:$0xff] %vm313, 0.0
        %325 = vst.msk [vmem:[#allocation2 + $0x58] sm:$0xff] %vm313, 0.0
        %326 = vst.msk [vmem:[#allocation2 + $0x60] sm:$0xff] %vm313, 0.0
        %327 = vst.msk [vmem:[#allocation2 + $0x68] sm:$0xff] %vm313, 0.0
        %328 = vst.msk [vmem:[#allocation2 + $0x70] sm:$0xff] %vm313, 0.0
        %329 = vst.msk [vmem:[#allocation2 + $0x78] sm:$0xff] %vm313, 0.0
        %330 = vst.msk [vmem:[#allocation2 + $0x80] sm:$0xff] %vm313, 0.0
        %331 = vst.msk [vmem:[#allocation2 + $0x88] sm:$0xff] %vm313, 0.0
        %332 = vst.msk [vmem:[#allocation2 + $0x90] sm:$0xff] %vm313, 0.0
        %333 = vst.msk [vmem:[#allocation2 + $0x98] sm:$0xff] %vm313, 0.0
        %334 = vst.msk [vmem:[#allocation2 + $0xa0] sm:$0xff] %vm313, 0.0
        %335 = vst.msk [vmem:[#allocation2 + $0xa8] sm:$0xff] %vm313, 0.0
        %336 = vst.msk [vmem:[#allocation2 + $0xb0] sm:$0xff] %vm313, 0.0
        %337 = vst.msk [vmem:[#allocation2 + $0xb8] sm:$0xff] %vm313, 0.0
        %338 = vst.msk [vmem:[#allocation2 + $0xc0] sm:$0xff] %vm313, 0.0
        %339 = vst.msk [vmem:[#allocation2 + $0xc8] sm:$0xff] %vm313, 0.0
        %340 = vst.msk [vmem:[#allocation2 + $0xd0] sm:$0xff] %vm313, 0.0
        %341 = vst.msk [vmem:[#allocation2 + $0xd8] sm:$0xff] %vm313, 0.0
        %342 = vst.msk [vmem:[#allocation2 + $0xe0] sm:$0xff] %vm313, 0.0
        %343 = vst.msk [vmem:[#allocation2 + $0xe8] sm:$0xff] %vm313, 0.0
        %344 = vst.msk [vmem:[#allocation2 + $0xf0] sm:$0xff] %vm313, 0.0
        %345 = vst.msk [vmem:[#allocation2 + $0xf8] sm:$0xff] %vm313, 0.0
        %346 = vst.msk [vmem:[#allocation2 + $0x100] sm:$0xff] %vm313, 0.0
        %347 = vst.msk [vmem:[#allocation2 + $0x108] sm:$0xff] %vm313, 0.0
        %348 = vst.msk [vmem:[#allocation2 + $0x110] sm:$0xff] %vm313, 0.0
        %349 = vst.msk [vmem:[#allocation2 + $0x118] sm:$0xff] %vm313, 0.0
        %350 = vst.msk [vmem:[#allocation2 + $0x120] sm:$0xff] %vm313, 0.0
        %351 = vst.msk [vmem:[#allocation2 + $0x128] sm:$0xff] %vm313, 0.0
        %352 = vst.msk [vmem:[#allocation2 + $0x130] sm:$0xff] %vm313, 0.0
        %353 = vst.msk [vmem:[#allocation2 + $0x138] sm:$0xff] %vm313, 0.0
        %354 = vst.msk [vmem:[#allocation2 + $0x140] sm:$0xff] %vm313, 0.0
        %355 = vst.msk [vmem:[#allocation2 + $0x148] sm:$0xff] %vm313, 0.0
        %356 = vst.msk [vmem:[#allocation2 + $0x150] sm:$0xff] %vm313, 0.0
        %357 = vst.msk [vmem:[#allocation2 + $0x158] sm:$0xff] %vm313, 0.0
        %358 = vst.msk [vmem:[#allocation2 + $0x160] sm:$0xff] %vm313, 0.0
        %359 = vst.msk [vmem:[#allocation2 + $0x168] sm:$0xff] %vm313, 0.0
        %360 = vst.msk [vmem:[#allocation2 + $0x170] sm:$0xff] %vm313, 0.0
        %361 = vst.msk [vmem:[#allocation2 + $0x178] sm:$0xff] %vm313, 0.0
        %362 = vst.msk [vmem:[#allocation2 + $0x180] sm:$0xff] %vm313, 0.0
        %363 = vst.msk [vmem:[#allocation2 + $0x188] sm:$0xff] %vm313, 0.0
        %364 = vst.msk [vmem:[#allocation2 + $0x190] sm:$0xff] %vm313, 0.0
        %365 = vst.msk [vmem:[#allocation2 + $0x198] sm:$0xff] %vm313, 0.0
        %366 = vst.msk [vmem:[#allocation2 + $0x1a0] sm:$0xff] %vm313, 0.0
        %367 = vst.msk [vmem:[#allocation2 + $0x1a8] sm:$0xff] %vm313, 0.0
        %368 = vst.msk [vmem:[#allocation2 + $0x1b0] sm:$0xff] %vm313, 0.0
        %369 = vst.msk [vmem:[#allocation2 + $0x1b8] sm:$0xff] %vm313, 0.0
        %370 = vst.msk [vmem:[#allocation2 + $0x1c0] sm:$0xff] %vm313, 0.0
        %371 = vst.msk [vmem:[#allocation2 + $0x1c8] sm:$0xff] %vm313, 0.0
        %372 = vst.msk [vmem:[#allocation2 + $0x1d0] sm:$0xff] %vm313, 0.0
        %373 = vst.msk [vmem:[#allocation2 + $0x1d8] sm:$0xff] %vm313, 0.0
        %374 = vst.msk [vmem:[#allocation2 + $0x1e0] sm:$0xff] %vm313, 0.0
        %375 = vst.msk [vmem:[#allocation2 + $0x1e8] sm:$0xff] %vm313, 0.0
        %376 = vst.msk [vmem:[#allocation2 + $0x1f0] sm:$0xff] %vm313, 0.0
        %377 = vst.msk [vmem:[#allocation2 + $0x1f8] sm:$0xff] %vm313, 0.0
      $region40: #{matmul_bn_act.1} parent=35 // pred_fallthru
        _
      %v378 = vld [vmem:[#allocation2] sm:$0xff]
      %v379 = vld [vmem:[#allocation2 + $0x8] sm:$0xff]
      %v380 = vld [vmem:[#allocation2 + $0x10] sm:$0xff]
      %v381 = vld [vmem:[#allocation2 + $0x18] sm:$0xff]
      %v382 = vld [vmem:[#allocation2 + $0x20] sm:$0xff]
      %v383 = vld [vmem:[#allocation2 + $0x28] sm:$0xff]
      %v384 = vld [vmem:[#allocation2 + $0x30] sm:$0xff]
      %v385 = vld [vmem:[#allocation2 + $0x38] sm:$0xff]
      %v386 = vld [vmem:[#allocation2 + $0x40] sm:$0xff]
      %v387 = vld [vmem:[#allocation2 + $0x48] sm:$0xff]
      %v388 = vld [vmem:[#allocation2 + $0x50] sm:$0xff]
      %v389 = vld [vmem:[#allocation2 + $0x58] sm:$0xff]
      %v390 = vld [vmem:[#allocation2 + $0x60] sm:$0xff]
      %v391 = vld [vmem:[#allocation2 + $0x68] sm:$0xff]
      %v392 = vld [vmem:[#allocation2 + $0x70] sm:$0xff]
      %v393 = vld [vmem:[#allocation2 + $0x78] sm:$0xff]
      %v394 = vld [vmem:[#allocation2 + $0x80] sm:$0xff]
      %v395 = vld [vmem:[#allocation2 + $0x88] sm:$0xff]
      %v396 = vld [vmem:[#allocation2 + $0x90] sm:$0xff]
      %v397 = vld [vmem:[#allocation2 + $0x98] sm:$0xff]
      %v398 = vld [vmem:[#allocation2 + $0xa0] sm:$0xff]
      %v399 = vld [vmem:[#allocation2 + $0xa8] sm:$0xff]
      %v400 = vld [vmem:[#allocation2 + $0xb0] sm:$0xff]
      %v401 = vld [vmem:[#allocation2 + $0xb8] sm:$0xff]
      %v402 = vld [vmem:[#allocation2 + $0xc0] sm:$0xff]
      %v403 = vld [vmem:[#allocation2 + $0xc8] sm:$0xff]
      %v404 = vld [vmem:[#allocation2 + $0xd0] sm:$0xff]
      %v405 = vld [vmem:[#allocation2 + $0xd8] sm:$0xff]
      %v406 = vld [vmem:[#allocation2 + $0xe0] sm:$0xff]
      %v407 = vld [vmem:[#allocation2 + $0xe8] sm:$0xff]
      %v408 = vld [vmem:[#allocation2 + $0xf0] sm:$0xff]
      %v409 = vld [vmem:[#allocation2 + $0xf8] sm:$0xff]
      %v410 = vld [vmem:[#allocation2 + $0x100] sm:$0xff]
      %v411 = vld [vmem:[#allocation2 + $0x108] sm:$0xff]
      %v412 = vld [vmem:[#allocation2 + $0x110] sm:$0xff]
      %v413 = vld [vmem:[#allocation2 + $0x118] sm:$0xff]
      %v414 = vld [vmem:[#allocation2 + $0x120] sm:$0xff]
      %v415 = vld [vmem:[#allocation2 + $0x128] sm:$0xff]
      %v416 = vld [vmem:[#allocation2 + $0x130] sm:$0xff]
      %v417 = vld [vmem:[#allocation2 + $0x138] sm:$0xff]
      %v418 = vld [vmem:[#allocation2 + $0x140] sm:$0xff]
      %v419 = vld [vmem:[#allocation2 + $0x148] sm:$0xff]
      %v420 = vld [vmem:[#allocation2 + $0x150] sm:$0xff]
      %v421 = vld [vmem:[#allocation2 + $0x158] sm:$0xff]
      %v422 = vld [vmem:[#allocation2 + $0x160] sm:$0xff]
      %v423 = vld [vmem:[#allocation2 + $0x168] sm:$0xff]
      %v424 = vld [vmem:[#allocation2 + $0x170] sm:$0xff]
      %v425 = vld [vmem:[#allocation2 + $0x178] sm:$0xff]
      %v426 = vld [vmem:[#allocation2 + $0x180] sm:$0xff]
      %v427 = vld [vmem:[#allocation2 + $0x188] sm:$0xff]
      %v428 = vld [vmem:[#allocation2 + $0x190] sm:$0xff]
      %v429 = vld [vmem:[#allocation2 + $0x198] sm:$0xff]
      %v430 = vld [vmem:[#allocation2 + $0x1a0] sm:$0xff]
      %v431 = vld [vmem:[#allocation2 + $0x1a8] sm:$0xff]
      %v432 = vld [vmem:[#allocation2 + $0x1b0] sm:$0xff]
      %v433 = vld [vmem:[#allocation2 + $0x1b8] sm:$0xff]
      %v434 = vld [vmem:[#allocation2 + $0x1c0] sm:$0xff]
      %v435 = vld [vmem:[#allocation2 + $0x1c8] sm:$0xff]
      %v436 = vld [vmem:[#allocation2 + $0x1d0] sm:$0xff]
      %v437 = vld [vmem:[#allocation2 + $0x1d8] sm:$0xff]
      %v438 = vld [vmem:[#allocation2 + $0x1e0] sm:$0xff]
      %v439 = vld [vmem:[#allocation2 + $0x1e8] sm:$0xff]
      %v440 = vld [vmem:[#allocation2 + $0x1f0] sm:$0xff]
      %v441 = vld [vmem:[#allocation2 + $0x1f8] sm:$0xff]
      %v442 = vld [vmem:[%s281] sm:$0xff]
      %v443 = vld [vmem:[%s281 + $0x8] sm:$0xff]
      %v444 = vld [vmem:[%s281 + $0x10] sm:$0xff]
      %v445 = vld [vmem:[%s281 + $0x18] sm:$0xff]
      %v446 = vld [vmem:[%s281 + $0x20] sm:$0xff]
      %v447 = vld [vmem:[%s281 + $0x28] sm:$0xff]
      %v448 = vld [vmem:[%s281 + $0x30] sm:$0xff]
      %v449 = vld [vmem:[%s281 + $0x38] sm:$0xff]
      %v450 = vld [vmem:[%s281 + $0x40] sm:$0xff]
      %v451 = vld [vmem:[%s281 + $0x48] sm:$0xff]
      %v452 = vld [vmem:[%s281 + $0x50] sm:$0xff]
      %v453 = vld [vmem:[%s281 + $0x58] sm:$0xff]
      %v454 = vld [vmem:[%s281 + $0x60] sm:$0xff]
      %v455 = vld [vmem:[%s281 + $0x68] sm:$0xff]
      %v456 = vld [vmem:[%s281 + $0x70] sm:$0xff]
      %v457 = vld [vmem:[%s281 + $0x78] sm:$0xff]
      %v458 = vld [vmem:[%s281 + $0x80] sm:$0xff]
      %v459 = vld [vmem:[%s281 + $0x88] sm:$0xff]
      %v460 = vld [vmem:[%s281 + $0x90] sm:$0xff]
      %v461 = vld [vmem:[%s281 + $0x98] sm:$0xff]
      %v462 = vld [vmem:[%s281 + $0xa0] sm:$0xff]
      %v463 = vld [vmem:[%s281 + $0xa8] sm:$0xff]
      %v464 = vld [vmem:[%s281 + $0xb0] sm:$0xff]
      %v465 = vld [vmem:[%s281 + $0xb8] sm:$0xff]
      %v466 = vld [vmem:[%s281 + $0xc0] sm:$0xff]
      %v467 = vld [vmem:[%s281 + $0xc8] sm:$0xff]
      %v468 = vld [vmem:[%s281 + $0xd0] sm:$0xff]
      %v469 = vld [vmem:[%s281 + $0xd8] sm:$0xff]
      %v470 = vld [vmem:[%s281 + $0xe0] sm:$0xff]
      %v471 = vld [vmem:[%s281 + $0xe8] sm:$0xff]
      %v472 = vld [vmem:[%s281 + $0xf0] sm:$0xff]
      %v473 = vld [vmem:[%s281 + $0xf8] sm:$0xff]
      %v474 = vld [vmem:[%s281 + $0x100] sm:$0xff]
      %v475 = vld [vmem:[%s281 + $0x108] sm:$0xff]
      %v476 = vld [vmem:[%s281 + $0x110] sm:$0xff]
      %v477 = vld [vmem:[%s281 + $0x118] sm:$0xff]
      %v478 = vld [vmem:[%s281 + $0x120] sm:$0xff]
      %v479 = vld [vmem:[%s281 + $0x128] sm:$0xff]
      %v480 = vld [vmem:[%s281 + $0x130] sm:$0xff]
      %v481 = vld [vmem:[%s281 + $0x138] sm:$0xff]
      %v482 = vld [vmem:[%s281 + $0x140] sm:$0xff]
      %v483 = vld [vmem:[%s281 + $0x148] sm:$0xff]
      %v484 = vld [vmem:[%s281 + $0x150] sm:$0xff]
      %v485 = vld [vmem:[%s281 + $0x158] sm:$0xff]
      %v486 = vld [vmem:[%s281 + $0x160] sm:$0xff]
      %v487 = vld [vmem:[%s281 + $0x168] sm:$0xff]
      %v488 = vld [vmem:[%s281 + $0x170] sm:$0xff]
      %v489 = vld [vmem:[%s281 + $0x178] sm:$0xff]
      %v490 = vld [vmem:[%s281 + $0x180] sm:$0xff]
      %v491 = vld [vmem:[%s281 + $0x188] sm:$0xff]
      %v492 = vld [vmem:[%s281 + $0x190] sm:$0xff]
      %v493 = vld [vmem:[%s281 + $0x198] sm:$0xff]
      %v494 = vld [vmem:[%s281 + $0x1a0] sm:$0xff]
      %v495 = vld [vmem:[%s281 + $0x1a8] sm:$0xff]
      %v496 = vld [vmem:[%s281 + $0x1b0] sm:$0xff]
      %v497 = vld [vmem:[%s281 + $0x1b8] sm:$0xff]
      %v498 = vld [vmem:[%s281 + $0x1c0] sm:$0xff]
      %v499 = vld [vmem:[%s281 + $0x1c8] sm:$0xff]
      %v500 = vld [vmem:[%s281 + $0x1d0] sm:$0xff]
      %v501 = vld [vmem:[%s281 + $0x1d8] sm:$0xff]
      %v502 = vld [vmem:[%s281 + $0x1e0] sm:$0xff]
      %v503 = vld [vmem:[%s281 + $0x1e8] sm:$0xff]
      %v504 = vld [vmem:[%s281 + $0x1f0] sm:$0xff]
      %v505 = vld [vmem:[%s281 + $0x1f8] sm:$0xff]
      %v506 = vld [vmem:[%s291] sm:$0xf]
      %v507 = vld [vmem:[%s291 + $0x4] sm:$0xf]
      %v508 = vld [vmem:[%s291 + $0x8] sm:$0xf]
      %v509 = vld [vmem:[%s291 + $0xc] sm:$0xf]
      %v510 = vld [vmem:[%s291 + $0x10] sm:$0xf]
      %v511 = vld [vmem:[%s291 + $0x14] sm:$0xf]
      %v512 = vld [vmem:[%s291 + $0x18] sm:$0xf]
      %v513 = vld [vmem:[%s291 + $0x1c] sm:$0xf]
      %v514 = vld [vmem:[%s291 + $0x20] sm:$0xf]
      %v515 = vld [vmem:[%s291 + $0x24] sm:$0xf]
      %v516 = vld [vmem:[%s291 + $0x28] sm:$0xf]
      %v517 = vld [vmem:[%s291 + $0x2c] sm:$0xf]
      %v518 = vld [vmem:[%s291 + $0x30] sm:$0xf]
      %v519 = vld [vmem:[%s291 + $0x34] sm:$0xf]
      %v520 = vld [vmem:[%s291 + $0x38] sm:$0xf]
      %v521 = vld [vmem:[%s291 + $0x3c] sm:$0xf]
      %v522 = vld [vmem:[%s291 + $0x40] sm:$0xf]
      %v523 = vld [vmem:[%s291 + $0x44] sm:$0xf]
      %v524 = vld [vmem:[%s291 + $0x48] sm:$0x3]
      %v589 = vunpack.c.l.b16 %v442
      %v590 = vunpack.c.h.b16 %v442
      %v591 = vunpack.c.l.b16 %v443
      %v592 = vunpack.c.h.b16 %v443
      %v593 = vunpack.c.l.b16 %v444
      %v594 = vunpack.c.h.b16 %v444
      %v595 = vunpack.c.l.b16 %v445
      %v596 = vunpack.c.h.b16 %v445
      %v597 = vunpack.c.l.b16 %v446
      %v598 = vunpack.c.h.b16 %v446
      %v599 = vunpack.c.l.b16 %v447
      %v600 = vunpack.c.h.b16 %v447
      %v601 = vunpack.c.l.b16 %v448
      %v602 = vunpack.c.h.b16 %v448
      %v603 = vunpack.c.l.b16 %v449
      %v604 = vunpack.c.h.b16 %v449
      %v605 = vunpack.c.l.b16 %v450
      %v606 = vunpack.c.h.b16 %v450
      %v607 = vunpack.c.l.b16 %v451
      %v608 = vunpack.c.h.b16 %v451
      %v609 = vunpack.c.l.b16 %v452
      %v610 = vunpack.c.h.b16 %v452
      %v611 = vunpack.c.l.b16 %v453
      %v612 = vunpack.c.h.b16 %v453
      %v613 = vunpack.c.l.b16 %v454
      %v614 = vunpack.c.h.b16 %v454
      %v615 = vunpack.c.l.b16 %v455
      %v616 = vunpack.c.h.b16 %v455
      %v617 = vunpack.c.l.b16 %v456
      %v618 = vunpack.c.h.b16 %v456
      %v619 = vunpack.c.l.b16 %v457
      %v620 = vunpack.c.h.b16 %v457
      %v621 = vunpack.c.l.b16 %v458
      %v622 = vunpack.c.h.b16 %v458
      %v623 = vunpack.c.l.b16 %v459
      %v624 = vunpack.c.h.b16 %v459
      %v625 = vunpack.c.l.b16 %v460
      %v626 = vunpack.c.h.b16 %v460
      %v627 = vunpack.c.l.b16 %v461
      %v628 = vunpack.c.h.b16 %v461
      %v629 = vunpack.c.l.b16 %v462
      %v630 = vunpack.c.h.b16 %v462
      %v631 = vunpack.c.l.b16 %v463
      %v632 = vunpack.c.h.b16 %v463
      %v633 = vunpack.c.l.b16 %v464
      %v634 = vunpack.c.h.b16 %v464
      %v635 = vunpack.c.l.b16 %v465
      %v636 = vunpack.c.h.b16 %v465
      %v637 = vunpack.c.l.b16 %v466
      %v638 = vunpack.c.h.b16 %v466
      %v639 = vunpack.c.l.b16 %v467
      %v640 = vunpack.c.h.b16 %v467
      %v641 = vunpack.c.l.b16 %v468
      %v642 = vunpack.c.h.b16 %v468
      %v643 = vunpack.c.l.b16 %v469
      %v644 = vunpack.c.h.b16 %v469
      %v645 = vunpack.c.l.b16 %v470
      %v646 = vunpack.c.h.b16 %v470
      %v647 = vunpack.c.l.b16 %v471
      %v648 = vunpack.c.h.b16 %v471
      %v649 = vunpack.c.l.b16 %v472
      %v650 = vunpack.c.h.b16 %v472
      %v651 = vunpack.c.l.b16 %v473
      %v652 = vunpack.c.h.b16 %v473
      %v653 = vunpack.c.l.b16 %v474
      %v654 = vunpack.c.h.b16 %v474
      %v655 = vunpack.c.l.b16 %v475
      %v656 = vunpack.c.h.b16 %v475
      %v657 = vunpack.c.l.b16 %v476
      %v658 = vunpack.c.h.b16 %v476
      %v659 = vunpack.c.l.b16 %v477
      %v660 = vunpack.c.h.b16 %v477
      %v661 = vunpack.c.l.b16 %v478
      %v662 = vunpack.c.h.b16 %v478
      %v663 = vunpack.c.l.b16 %v479
      %v664 = vunpack.c.h.b16 %v479
      %v665 = vunpack.c.l.b16 %v480
      %v666 = vunpack.c.h.b16 %v480
      %v667 = vunpack.c.l.b16 %v481
      %v668 = vunpack.c.h.b16 %v481
      %v669 = vunpack.c.l.b16 %v482
      %v670 = vunpack.c.h.b16 %v482
      %v671 = vunpack.c.l.b16 %v483
      %v672 = vunpack.c.h.b16 %v483
      %v673 = vunpack.c.l.b16 %v484
      %v674 = vunpack.c.h.b16 %v484
      %v675 = vunpack.c.l.b16 %v485
      %v676 = vunpack.c.h.b16 %v485
      %v677 = vunpack.c.l.b16 %v486
      %v678 = vunpack.c.h.b16 %v486
      %v679 = vunpack.c.l.b16 %v487
      %v680 = vunpack.c.h.b16 %v487
      %v681 = vunpack.c.l.b16 %v488
      %v682 = vunpack.c.h.b16 %v488
      %v683 = vunpack.c.l.b16 %v489
      %v684 = vunpack.c.h.b16 %v489
      %v685 = vunpack.c.l.b16 %v490
      %v686 = vunpack.c.h.b16 %v490
      %v687 = vunpack.c.l.b16 %v491
      %v688 = vunpack.c.h.b16 %v491
      %v689 = vunpack.c.l.b16 %v492
      %v690 = vunpack.c.h.b16 %v492
      %v691 = vunpack.c.l.b16 %v493
      %v692 = vunpack.c.h.b16 %v493
      %v693 = vunpack.c.l.b16 %v494
      %v694 = vunpack.c.h.b16 %v494
      %v695 = vunpack.c.l.b16 %v495
      %v696 = vunpack.c.h.b16 %v495
      %v697 = vunpack.c.l.b16 %v496
      %v698 = vunpack.c.h.b16 %v496
      %v699 = vunpack.c.l.b16 %v497
      %v700 = vunpack.c.h.b16 %v497
      %v701 = vunpack.c.l.b16 %v498
      %v702 = vunpack.c.h.b16 %v498
      %v703 = vunpack.c.l.b16 %v499
      %v704 = vunpack.c.h.b16 %v499
      %v705 = vunpack.c.l.b16 %v500
      %v706 = vunpack.c.h.b16 %v500
      %v707 = vunpack.c.l.b16 %v501
      %v708 = vunpack.c.h.b16 %v501
      %v709 = vunpack.c.l.b16 %v502
      %v710 = vunpack.c.h.b16 %v502
      %v711 = vunpack.c.l.b16 %v503
      %v712 = vunpack.c.h.b16 %v503
      %v713 = vunpack.c.l.b16 %v504
      %v714 = vunpack.c.h.b16 %v504
      %v715 = vunpack.c.l.b16 %v505
      %v716 = vunpack.c.h.b16 %v505
      %v717 = vpack.c.b16 %v591, %v589
      %v718 = vpack.c.b16 %v592, %v590
      %v719 = vpack.c.b16 %v595, %v593
      %v720 = vpack.c.b16 %v596, %v594
      %v721 = vpack.c.b16 %v599, %v597
      %v722 = vpack.c.b16 %v600, %v598
      %v723 = vpack.c.b16 %v603, %v601
      %v724 = vpack.c.b16 %v604, %v602
      %v725 = vpack.c.b16 %v607, %v605
      %v726 = vpack.c.b16 %v608, %v606
      %v727 = vpack.c.b16 %v611, %v609
      %v728 = vpack.c.b16 %v612, %v610
      %v729 = vpack.c.b16 %v615, %v613
      %v730 = vpack.c.b16 %v616, %v614
      %v731 = vpack.c.b16 %v619, %v617
      %v732 = vpack.c.b16 %v620, %v618
      %v733 = vpack.c.b16 %v623, %v621
      %v734 = vpack.c.b16 %v624, %v622
      %v735 = vpack.c.b16 %v627, %v625
      %v736 = vpack.c.b16 %v628, %v626
      %v737 = vpack.c.b16 %v631, %v629
      %v738 = vpack.c.b16 %v632, %v630
      %v739 = vpack.c.b16 %v635, %v633
      %v740 = vpack.c.b16 %v636, %v634
      %v741 = vpack.c.b16 %v639, %v637
      %v742 = vpack.c.b16 %v640, %v638
      %v743 = vpack.c.b16 %v643, %v641
      %v744 = vpack.c.b16 %v644, %v642
      %v745 = vpack.c.b16 %v647, %v645
      %v746 = vpack.c.b16 %v648, %v646
      %v747 = vpack.c.b16 %v651, %v649
      %v748 = vpack.c.b16 %v652, %v650
      %v749 = vpack.c.b16 %v655, %v653
      %v750 = vpack.c.b16 %v656, %v654
      %v751 = vpack.c.b16 %v659, %v657
      %v752 = vpack.c.b16 %v660, %v658
      %v753 = vpack.c.b16 %v663, %v661
      %v754 = vpack.c.b16 %v664, %v662
      %v755 = vpack.c.b16 %v667, %v665
      %v756 = vpack.c.b16 %v668, %v666
      %v757 = vpack.c.b16 %v671, %v669
      %v758 = vpack.c.b16 %v672, %v670
      %v759 = vpack.c.b16 %v675, %v673
      %v760 = vpack.c.b16 %v676, %v674
      %v761 = vpack.c.b16 %v679, %v677
      %v762 = vpack.c.b16 %v680, %v678
      %v763 = vpack.c.b16 %v683, %v681
      %v764 = vpack.c.b16 %v684, %v682
      %v765 = vpack.c.b16 %v687, %v685
      %v766 = vpack.c.b16 %v688, %v686
      %v767 = vpack.c.b16 %v691, %v689
      %v768 = vpack.c.b16 %v692, %v690
      %v769 = vpack.c.b16 %v695, %v693
      %v770 = vpack.c.b16 %v696, %v694
      %v771 = vpack.c.b16 %v699, %v697
      %v772 = vpack.c.b16 %v700, %v698
      %v773 = vpack.c.b16 %v703, %v701
      %v774 = vpack.c.b16 %v704, %v702
      %v775 = vpack.c.b16 %v707, %v705
      %v776 = vpack.c.b16 %v708, %v706
      %v777 = vpack.c.b16 %v711, %v709
      %v778 = vpack.c.b16 %v712, %v710
      %v779 = vpack.c.b16 %v715, %v713
      %v780 = vpack.c.b16 %v716, %v714
      %v832 = vunpack.c.l.b16 %v506
      %v833 = vunpack.c.l.b16 %v507
      %v834 = vunpack.c.l.b16 %v508
      %v835 = vunpack.c.l.b16 %v509
      %v836 = vunpack.c.l.b16 %v510
      %v837 = vunpack.c.l.b16 %v511
      %v838 = vunpack.c.l.b16 %v512
      %v839 = vunpack.c.l.b16 %v513
      %v840 = vunpack.c.l.b16 %v514
      %v841 = vunpack.c.l.b16 %v515
      %v842 = vunpack.c.l.b16 %v516
      %v843 = vunpack.c.l.b16 %v517
      %v844 = vunpack.c.l.b16 %v518
      %v845 = vunpack.c.l.b16 %v519
      %v846 = vunpack.c.l.b16 %v520
      %v847 = vunpack.c.l.b16 %v521
      %v848 = vunpack.c.l.b16 %v522
      %v849 = vunpack.c.l.b16 %v523
      %v850 = vunpack.c.l.b16 %v524
      %v851 = vpack.c.b16 %v833, %v832
      %v852 = vpack.c.b16 %v835, %v834
      %v853 = vpack.c.b16 %v837, %v836
      %v854 = vpack.c.b16 %v839, %v838
      %v855 = vpack.c.b16 %v841, %v840
      %v856 = vpack.c.b16 %v843, %v842
      %v857 = vpack.c.b16 %v845, %v844
      %v858 = vpack.c.b16 %v847, %v846
      %v859 = vpack.c.b16 %v849, %v848
      %v860 = vpack.c.b16 %v850, %v850
      %vm870 = vcmask 154624
      %v872 = vsel %vm870, %v718, 0
      %v875 = vsel %vm870, %v720, 0
      %v878 = vsel %vm870, %v722, 0
      %v881 = vsel %vm870, %v724, 0
      %v884 = vsel %vm870, %v726, 0
      %v887 = vsel %vm870, %v728, 0
      %v890 = vsel %vm870, %v730, 0
      %v893 = vsel %vm870, %v732, 0
      %v896 = vsel %vm870, %v734, 0
      %v899 = vsel %vm870, %v736, 0
      %v902 = vsel %vm870, %v738, 0
      %v905 = vsel %vm870, %v740, 0
      %v908 = vsel %vm870, %v742, 0
      %v911 = vsel %vm870, %v744, 0
      %v914 = vsel %vm870, %v746, 0
      %v917 = vsel %vm870, %v748, 0
      %v920 = vsel %vm870, %v750, 0
      %v923 = vsel %vm870, %v752, 0
      %v926 = vsel %vm870, %v754, 0
      %v929 = vsel %vm870, %v756, 0
      %v932 = vsel %vm870, %v758, 0
      %v935 = vsel %vm870, %v760, 0
      %v938 = vsel %vm870, %v762, 0
      %v941 = vsel %vm870, %v764, 0
      %v944 = vsel %vm870, %v766, 0
      %v947 = vsel %vm870, %v768, 0
      %v950 = vsel %vm870, %v770, 0
      %v953 = vsel %vm870, %v772, 0
      %v956 = vsel %vm870, %v774, 0
      %v959 = vsel %vm870, %v776, 0
      %v962 = vsel %vm870, %v778, 0
      %v965 = vsel %vm870, %v780, 0
      %vm967 = vcmask 1040384
      %vm968 = vcmask 1041408
      %v969 = vsel %vm967, 4294967295, 65535
      %v970 = vsel %vm968, %v969, 0
      %v972 = vand.u32 %v860, %v970
      %974 = vmatprep.subr.bf16.mxu0 0
      %975 = vmatpush1.bf16.msra.mxu0 %v851
      %976 = vmatprep.subr.bf16.mxu0 0
      %977 = vmatpush1.bf16.msra.mxu0 %v852
      %978 = vmatprep.subr.bf16.mxu0 0
      %979 = vmatpush1.bf16.msra.mxu0 %v853
      %980 = vmatprep.subr.bf16.mxu0 0
      %981 = vmatpush1.bf16.msra.mxu0 %v854
      %982 = vmatprep.subr.bf16.mxu0 0
      %983 = vmatpush1.bf16.msra.mxu0 %v855
      %984 = vmatprep.subr.bf16.mxu0 0
      %985 = vmatpush1.bf16.msra.mxu0 %v856
      %986 = vmatprep.subr.bf16.mxu0 0
      %987 = vmatpush1.bf16.msra.mxu0 %v857
      %988 = vmatprep.subr.bf16.mxu0 0
      %989 = vmatpush1.bf16.msra.mxu0 %v858
      %990 = vmatprep.subr.bf16.mxu0 0
      %991 = vmatpush1.bf16.msra.mxu0 %v859
      %992 = vmatprep.subr.bf16.mxu0 0
      %993 = vmatpush1.bf16.msra.mxu0 %v972
      %994 = vmatprep.subr.bf16.mxu0 0
      %995 = vmatpush1.bf16.msra.mxu0 0
      %996 = vmatprep.subr.bf16.mxu0 0
      %997 = vmatpush1.bf16.msra.mxu0 0
      %998 = vmatprep.subr.bf16.mxu0 0
      %999 = vmatpush1.bf16.msra.mxu0 0
      %1000 = vmatprep.subr.bf16.mxu0 0
      %1001 = vmatpush1.bf16.msra.mxu0 0
      %1002 = vmatprep.subr.bf16.mxu0 0
      %1003 = vmatpush1.bf16.msra.mxu0 0
      %1004 = vmatprep.subr.bf16.mxu0 0
      %1005 = vmatpush1.bf16.msra.mxu0 0
      %1006 = vmatprep.mubr.bf16.mxu0 %v872
      %1007 = vmatmul.mubr.bf16.gmra.mrb[0].mxu0 %v717
      %v1008 = vpop.f32.mrb[0].mxu0
      %v1009 = vadd.f32 0.0, %v1008
      %v1010 = vpop.f32.mrb[0].mxu0
      %v1011 = vpop.f32.mrb[0].mxu0
      %v1012 = vadd.f32 0.0, %v1011
      %v1013 = vpop.f32.mrb[0].mxu0
      %1014 = vmatprep.mubr.bf16.mxu0 %v875
      %1015 = vmatmul.mubr.bf16.gmra.mrb[0].mxu0 %v719
      %v1016 = vpop.f32.mrb[0].mxu0
      %v1017 = vadd.f32 0.0, %v1016
      %v1018 = vpop.f32.mrb[0].mxu0
      %v1019 = vpop.f32.mrb[0].mxu0
      %v1020 = vadd.f32 0.0, %v1019
      %v1021 = vpop.f32.mrb[0].mxu0
      %1022 = vmatprep.mubr.bf16.mxu0 %v878
      %1023 = vmatmul.mubr.bf16.gmra.mrb[0].mxu0 %v721
      %v1024 = vpop.f32.mrb[0].mxu0
      %v1025 = vadd.f32 0.0, %v1024
      %v1026 = vpop.f32.mrb[0].mxu0
      %v1027 = vpop.f32.mrb[0].mxu0
      %v1028 = vadd.f32 0.0, %v1027
      %v1029 = vpop.f32.mrb[0].mxu0
      %1030 = vmatprep.mubr.bf16.mxu0 %v881
      %1031 = vmatmul.mubr.bf16.gmra.mrb[0].mxu0 %v723
      %v1032 = vpop.f32.mrb[0].mxu0
      %v1033 = vadd.f32 0.0, %v1032
      %v1034 = vpop.f32.mrb[0].mxu0
      %v1035 = vpop.f32.mrb[0].mxu0
      %v1036 = vadd.f32 0.0, %v1035
      %v1037 = vpop.f32.mrb[0].mxu0
      %1038 = vmatprep.mubr.bf16.mxu0 %v884
      %1039 = vmatmul.mubr.bf16.gmra.mrb[0].mxu0 %v725
      %v1040 = vpop.f32.mrb[0].mxu0
      %v1041 = vadd.f32 0.0, %v1040
      %v1042 = vpop.f32.mrb[0].mxu0
      %v1043 = vpop.f32.mrb[0].mxu0
      %v1044 = vadd.f32 0.0, %v1043
      %v1045 = vpop.f32.mrb[0].mxu0
      %1046 = vmatprep.mubr.bf16.mxu0 %v887
      %1047 = vmatmul.mubr.bf16.gmra.mrb[0].mxu0 %v727
      %v1048 = vpop.f32.mrb[0].mxu0
      %v1049 = vadd.f32 0.0, %v1048
      %v1050 = vpop.f32.mrb[0].mxu0
      %v1051 = vpop.f32.mrb[0].mxu0
      %v1052 = vadd.f32 0.0, %v1051
      %v1053 = vpop.f32.mrb[0].mxu0
      %1054 = vmatprep.mubr.bf16.mxu0 %v890
      %1055 = vmatmul.mubr.bf16.gmra.mrb[0].mxu0 %v729
      %v1056 = vpop.f32.mrb[0].mxu0
      %v1057 = vadd.f32 0.0, %v1056
      %v1058 = vpop.f32.mrb[0].mxu0
      %v1059 = vpop.f32.mrb[0].mxu0
      %v1060 = vadd.f32 0.0, %v1059
      %v1061 = vpop.f32.mrb[0].mxu0
      %1062 = vmatprep.mubr.bf16.mxu0 %v893
      %1063 = vmatmul.mubr.bf16.gmra.mrb[0].mxu0 %v731
      %v1064 = vpop.f32.mrb[0].mxu0
      %v1065 = vadd.f32 0.0, %v1064
      %v1066 = vpop.f32.mrb[0].mxu0
      %v1067 = vpop.f32.mrb[0].mxu0
      %v1068 = vadd.f32 0.0, %v1067
      %v1069 = vpop.f32.mrb[0].mxu0
      %1070 = vmatprep.mubr.bf16.mxu0 %v896
      %1071 = vmatmul.mubr.bf16.gmra.mrb[0].mxu0 %v733
      %v1072 = vpop.f32.mrb[0].mxu0
      %v1073 = vadd.f32 0.0, %v1072
      %v1074 = vpop.f32.mrb[0].mxu0
      %v1075 = vpop.f32.mrb[0].mxu0
      %v1076 = vadd.f32 0.0, %v1075
      %v1077 = vpop.f32.mrb[0].mxu0
      %1078 = vmatprep.mubr.bf16.mxu0 %v899
      %1079 = vmatmul.mubr.bf16.gmra.mrb[0].mxu0 %v735
      %v1080 = vpop.f32.mrb[0].mxu0
      %v1081 = vadd.f32 0.0, %v1080
      %v1082 = vpop.f32.mrb[0].mxu0
      %v1083 = vpop.f32.mrb[0].mxu0
      %v1084 = vadd.f32 0.0, %v1083
      %v1085 = vpop.f32.mrb[0].mxu0
      %1086 = vmatprep.mubr.bf16.mxu0 %v902
      %1087 = vmatmul.mubr.bf16.gmra.mrb[0].mxu0 %v737
      %v1088 = vpop.f32.mrb[0].mxu0
      %v1089 = vadd.f32 0.0, %v1088
      %v1090 = vpop.f32.mrb[0].mxu0
      %v1091 = vpop.f32.mrb[0].mxu0
      %v1092 = vadd.f32 0.0, %v1091
      %v1093 = vpop.f32.mrb[0].mxu0
      %1094 = vmatprep.mubr.bf16.mxu0 %v905
      %1095 = vmatmul.mubr.bf16.gmra.mrb[0].mxu0 %v739
      %v1096 = vpop.f32.mrb[0].mxu0
      %v1097 = vadd.f32 0.0, %v1096
      %v1098 = vpop.f32.mrb[0].mxu0
      %v1099 = vpop.f32.mrb[0].mxu0
      %v1100 = vadd.f32 0.0, %v1099
      %v1101 = vpop.f32.mrb[0].mxu0
      %1102 = vmatprep.mubr.bf16.mxu0 %v908
      %1103 = vmatmul.mubr.bf16.gmra.mrb[0].mxu0 %v741
      %v1104 = vpop.f32.mrb[0].mxu0
      %v1105 = vadd.f32 0.0, %v1104
      %v1106 = vpop.f32.mrb[0].mxu0
      %v1107 = vpop.f32.mrb[0].mxu0
      %v1108 = vadd.f32 0.0, %v1107
      %v1109 = vpop.f32.mrb[0].mxu0
      %1110 = vmatprep.mubr.bf16.mxu0 %v911
      %1111 = vmatmul.mubr.bf16.gmra.mrb[0].mxu0 %v743
      %v1112 = vpop.f32.mrb[0].mxu0
      %v1113 = vadd.f32 0.0, %v1112
      %v1114 = vpop.f32.mrb[0].mxu0
      %v1115 = vpop.f32.mrb[0].mxu0
      %v1116 = vadd.f32 0.0, %v1115
      %v1117 = vpop.f32.mrb[0].mxu0
      %1118 = vmatprep.mubr.bf16.mxu0 %v914
      %1119 = vmatmul.mubr.bf16.gmra.mrb[0].mxu0 %v745
      %v1120 = vpop.f32.mrb[0].mxu0
      %v1121 = vadd.f32 0.0, %v1120
      %v1122 = vpop.f32.mrb[0].mxu0
      %v1123 = vpop.f32.mrb[0].mxu0
      %v1124 = vadd.f32 0.0, %v1123
      %v1125 = vpop.f32.mrb[0].mxu0
      %1126 = vmatprep.mubr.bf16.mxu0 %v917
      %1127 = vmatmul.mubr.bf16.gmra.mrb[0].mxu0 %v747
      %v1128 = vpop.f32.mrb[0].mxu0
      %v1129 = vadd.f32 0.0, %v1128
      %v1130 = vpop.f32.mrb[0].mxu0
      %v1131 = vpop.f32.mrb[0].mxu0
      %v1132 = vadd.f32 0.0, %v1131
      %v1133 = vpop.f32.mrb[0].mxu0
      %1134 = vmatprep.mubr.bf16.mxu0 %v920
      %1135 = vmatmul.mubr.bf16.gmra.mrb[0].mxu0 %v749
      %v1136 = vpop.f32.mrb[0].mxu0
      %v1137 = vadd.f32 0.0, %v1136
      %v1138 = vpop.f32.mrb[0].mxu0
      %v1139 = vpop.f32.mrb[0].mxu0
      %v1140 = vadd.f32 0.0, %v1139
      %v1141 = vpop.f32.mrb[0].mxu0
      %1142 = vmatprep.mubr.bf16.mxu0 %v923
      %1143 = vmatmul.mubr.bf16.gmra.mrb[0].mxu0 %v751
      %v1144 = vpop.f32.mrb[0].mxu0
      %v1145 = vadd.f32 0.0, %v1144
      %v1146 = vpop.f32.mrb[0].mxu0
      %v1147 = vpop.f32.mrb[0].mxu0
      %v1148 = vadd.f32 0.0, %v1147
      %v1149 = vpop.f32.mrb[0].mxu0
      %1150 = vmatprep.mubr.bf16.mxu0 %v926
      %1151 = vmatmul.mubr.bf16.gmra.mrb[0].mxu0 %v753
      %v1152 = vpop.f32.mrb[0].mxu0
      %v1153 = vadd.f32 0.0, %v1152
      %v1154 = vpop.f32.mrb[0].mxu0
      %v1155 = vpop.f32.mrb[0].mxu0
      %v1156 = vadd.f32 0.0, %v1155
      %v1157 = vpop.f32.mrb[0].mxu0
      %1158 = vmatprep.mubr.bf16.mxu0 %v929
      %1159 = vmatmul.mubr.bf16.gmra.mrb[0].mxu0 %v755
      %v1160 = vpop.f32.mrb[0].mxu0
      %v1161 = vadd.f32 0.0, %v1160
      %v1162 = vpop.f32.mrb[0].mxu0
      %v1163 = vpop.f32.mrb[0].mxu0
      %v1164 = vadd.f32 0.0, %v1163
      %v1165 = vpop.f32.mrb[0].mxu0
      %1166 = vmatprep.mubr.bf16.mxu0 %v932
      %1167 = vmatmul.mubr.bf16.gmra.mrb[0].mxu0 %v757
      %v1168 = vpop.f32.mrb[0].mxu0
      %v1169 = vadd.f32 0.0, %v1168
      %v1170 = vpop.f32.mrb[0].mxu0
      %v1171 = vpop.f32.mrb[0].mxu0
      %v1172 = vadd.f32 0.0, %v1171
      %v1173 = vpop.f32.mrb[0].mxu0
      %1174 = vmatprep.mubr.bf16.mxu0 %v935
      %1175 = vmatmul.mubr.bf16.gmra.mrb[0].mxu0 %v759
      %v1176 = vpop.f32.mrb[0].mxu0
      %v1177 = vadd.f32 0.0, %v1176
      %v1178 = vpop.f32.mrb[0].mxu0
      %v1179 = vpop.f32.mrb[0].mxu0
      %v1180 = vadd.f32 0.0, %v1179
      %v1181 = vpop.f32.mrb[0].mxu0
      %1182 = vmatprep.mubr.bf16.mxu0 %v938
      %1183 = vmatmul.mubr.bf16.gmra.mrb[0].mxu0 %v761
      %v1184 = vpop.f32.mrb[0].mxu0
      %v1185 = vadd.f32 0.0, %v1184
      %v1186 = vpop.f32.mrb[0].mxu0
      %v1187 = vpop.f32.mrb[0].mxu0
      %v1188 = vadd.f32 0.0, %v1187
      %v1189 = vpop.f32.mrb[0].mxu0
      %1190 = vmatprep.mubr.bf16.mxu0 %v941
      %1191 = vmatmul.mubr.bf16.gmra.mrb[0].mxu0 %v763
      %v1192 = vpop.f32.mrb[0].mxu0
      %v1193 = vadd.f32 0.0, %v1192
      %v1194 = vpop.f32.mrb[0].mxu0
      %v1195 = vpop.f32.mrb[0].mxu0
      %v1196 = vadd.f32 0.0, %v1195
      %v1197 = vpop.f32.mrb[0].mxu0
      %1198 = vmatprep.mubr.bf16.mxu0 %v944
      %1199 = vmatmul.mubr.bf16.gmra.mrb[0].mxu0 %v765
      %v1200 = vpop.f32.mrb[0].mxu0
      %v1201 = vadd.f32 0.0, %v1200
      %v1202 = vpop.f32.mrb[0].mxu0
      %v1203 = vpop.f32.mrb[0].mxu0
      %v1204 = vadd.f32 0.0, %v1203
      %v1205 = vpop.f32.mrb[0].mxu0
      %1206 = vmatprep.mubr.bf16.mxu0 %v947
      %1207 = vmatmul.mubr.bf16.gmra.mrb[0].mxu0 %v767
      %v1208 = vpop.f32.mrb[0].mxu0
      %v1209 = vadd.f32 0.0, %v1208
      %v1210 = vpop.f32.mrb[0].mxu0
      %v1211 = vpop.f32.mrb[0].mxu0
      %v1212 = vadd.f32 0.0, %v1211
      %v1213 = vpop.f32.mrb[0].mxu0
      %1214 = vmatprep.mubr.bf16.mxu0 %v950
      %1215 = vmatmul.mubr.bf16.gmra.mrb[0].mxu0 %v769
      %v1216 = vpop.f32.mrb[0].mxu0
      %v1217 = vadd.f32 0.0, %v1216
      %v1218 = vpop.f32.mrb[0].mxu0
      %v1219 = vpop.f32.mrb[0].mxu0
      %v1220 = vadd.f32 0.0, %v1219
      %v1221 = vpop.f32.mrb[0].mxu0
      %1222 = vmatprep.mubr.bf16.mxu0 %v953
      %1223 = vmatmul.mubr.bf16.gmra.mrb[0].mxu0 %v771
      %v1224 = vpop.f32.mrb[0].mxu0
      %v1225 = vadd.f32 0.0, %v1224
      %v1226 = vpop.f32.mrb[0].mxu0
      %v1227 = vpop.f32.mrb[0].mxu0
      %v1228 = vadd.f32 0.0, %v1227
      %v1229 = vpop.f32.mrb[0].mxu0
      %1230 = vmatprep.mubr.bf16.mxu0 %v956
      %1231 = vmatmul.mubr.bf16.gmra.mrb[0].mxu0 %v773
      %v1232 = vpop.f32.mrb[0].mxu0
      %v1233 = vadd.f32 0.0, %v1232
      %v1234 = vpop.f32.mrb[0].mxu0
      %v1235 = vpop.f32.mrb[0].mxu0
      %v1236 = vadd.f32 0.0, %v1235
      %v1237 = vpop.f32.mrb[0].mxu0
      %1238 = vmatprep.mubr.bf16.mxu0 %v959
      %1239 = vmatmul.mubr.bf16.gmra.mrb[0].mxu0 %v775
      %v1240 = vpop.f32.mrb[0].mxu0
      %v1241 = vadd.f32 0.0, %v1240
      %v1242 = vpop.f32.mrb[0].mxu0
      %v1243 = vpop.f32.mrb[0].mxu0
      %v1244 = vadd.f32 0.0, %v1243
      %v1245 = vpop.f32.mrb[0].mxu0
      %1246 = vmatprep.mubr.bf16.mxu0 %v962
      %1247 = vmatmul.mubr.bf16.gmra.mrb[0].mxu0 %v777
      %v1248 = vpop.f32.mrb[0].mxu0
      %v1249 = vadd.f32 0.0, %v1248
      %v1250 = vpop.f32.mrb[0].mxu0
      %v1251 = vpop.f32.mrb[0].mxu0
      %v1252 = vadd.f32 0.0, %v1251
      %v1253 = vpop.f32.mrb[0].mxu0
      %1254 = vmatprep.mubr.bf16.mxu0 %v965
      %1255 = vmatmul.mubr.bf16.gmra.mrb[0].mxu0 %v779
      %v1256 = vpop.f32.mrb[0].mxu0
      %v1257 = vadd.f32 0.0, %v1256
      %v1258 = vpop.f32.mrb[0].mxu0
      %v1259 = vpop.f32.mrb[0].mxu0
      %v1260 = vadd.f32 0.0, %v1259
      %v1261 = vpop.f32.mrb[0].mxu0
      %1262 = vdwg.mxu0
      %v1263 = vadd.f32 %v378, %v1009
      %v1264 = vadd.f32 %v379, %v1012
      %v1265 = vadd.f32 %v380, %v1017
      %v1266 = vadd.f32 %v381, %v1020
      %v1267 = vadd.f32 %v382, %v1025
      %v1268 = vadd.f32 %v383, %v1028
      %v1269 = vadd.f32 %v384, %v1033
      %v1270 = vadd.f32 %v385, %v1036
      %v1271 = vadd.f32 %v386, %v1041
      %v1272 = vadd.f32 %v387, %v1044
      %v1273 = vadd.f32 %v388, %v1049
      %v1274 = vadd.f32 %v389, %v1052
      %v1275 = vadd.f32 %v390, %v1057
      %v1276 = vadd.f32 %v391, %v1060
      %v1277 = vadd.f32 %v392, %v1065
      %v1278 = vadd.f32 %v393, %v1068
      %v1279 = vadd.f32 %v394, %v1073
      %v1280 = vadd.f32 %v395, %v1076
      %v1281 = vadd.f32 %v396, %v1081
      %v1282 = vadd.f32 %v397, %v1084
      %v1283 = vadd.f32 %v398, %v1089
      %v1284 = vadd.f32 %v399, %v1092
      %v1285 = vadd.f32 %v400, %v1097
      %v1286 = vadd.f32 %v401, %v1100
      %v1287 = vadd.f32 %v402, %v1105
      %v1288 = vadd.f32 %v403, %v1108
      %v1289 = vadd.f32 %v404, %v1113
      %v1290 = vadd.f32 %v405, %v1116
      %v1291 = vadd.f32 %v406, %v1121
      %v1292 = vadd.f32 %v407, %v1124
      %v1293 = vadd.f32 %v408, %v1129
      %v1294 = vadd.f32 %v409, %v1132
      %v1295 = vadd.f32 %v410, %v1137
      %v1296 = vadd.f32 %v411, %v1140
      %v1297 = vadd.f32 %v412, %v1145
      %v1298 = vadd.f32 %v413, %v1148
      %v1299 = vadd.f32 %v414, %v1153
      %v1300 = vadd.f32 %v415, %v1156
      %v1301 = vadd.f32 %v416, %v1161
      %v1302 = vadd.f32 %v417, %v1164
      %v1303 = vadd.f32 %v418, %v1169
      %v1304 = vadd.f32 %v419, %v1172
      %v1305 = vadd.f32 %v420, %v1177
      %v1306 = vadd.f32 %v421, %v1180
      %v1307 = vadd.f32 %v422, %v1185
      %v1308 = vadd.f32 %v423, %v1188
      %v1309 = vadd.f32 %v424, %v1193
      %v1310 = vadd.f32 %v425, %v1196
      %v1311 = vadd.f32 %v426, %v1201
      %v1312 = vadd.f32 %v427, %v1204
      %v1313 = vadd.f32 %v428, %v1209
      %v1314 = vadd.f32 %v429, %v1212
      %v1315 = vadd.f32 %v430, %v1217
      %v1316 = vadd.f32 %v431, %v1220
      %v1317 = vadd.f32 %v432, %v1225
      %v1318 = vadd.f32 %v433, %v1228
      %v1319 = vadd.f32 %v434, %v1233
      %v1320 = vadd.f32 %v435, %v1236
      %v1321 = vadd.f32 %v436, %v1241
      %v1322 = vadd.f32 %v437, %v1244
      %v1323 = vadd.f32 %v438, %v1249
      %v1324 = vadd.f32 %v439, %v1252
      %v1325 = vadd.f32 %v440, %v1257
      %v1326 = vadd.f32 %v441, %v1260
      %vm1327 = vcmask 523264
      %1328 = vst.msk [vmem:[#allocation2] sm:$0xff] %vm1327, %v1263
      %1329 = vst.msk [vmem:[#allocation2 + $0x8] sm:$0xff] %vm1327, %v1264
      %1330 = vst.msk [vmem:[#allocation2 + $0x10] sm:$0xff] %vm1327, %v1265
      %1331 = vst.msk [vmem:[#allocation2 + $0x18] sm:$0xff] %vm1327, %v1266
      %1332 = vst.msk [vmem:[#allocation2 + $0x20] sm:$0xff] %vm1327, %v1267
      %1333 = vst.msk [vmem:[#allocation2 + $0x28] sm:$0xff] %vm1327, %v1268
      %1334 = vst.msk [vmem:[#allocation2 + $0x30] sm:$0xff] %vm1327, %v1269
      %1335 = vst.msk [vmem:[#allocation2 + $0x38] sm:$0xff] %vm1327, %v1270
      %1336 = vst.msk [vmem:[#allocation2 + $0x40] sm:$0xff] %vm1327, %v1271
      %1337 = vst.msk [vmem:[#allocation2 + $0x48] sm:$0xff] %vm1327, %v1272
      %1338 = vst.msk [vmem:[#allocation2 + $0x50] sm:$0xff] %vm1327, %v1273
      %1339 = vst.msk [vmem:[#allocation2 + $0x58] sm:$0xff] %vm1327, %v1274
      %1340 = vst.msk [vmem:[#allocation2 + $0x60] sm:$0xff] %vm1327, %v1275
      %1341 = vst.msk [vmem:[#allocation2 + $0x68] sm:$0xff] %vm1327, %v1276
      %1342 = vst.msk [vmem:[#allocation2 + $0x70] sm:$0xff] %vm1327, %v1277
      %1343 = vst.msk [vmem:[#allocation2 + $0x78] sm:$0xff] %vm1327, %v1278
      %1344 = vst.msk [vmem:[#allocation2 + $0x80] sm:$0xff] %vm1327, %v1279
      %1345 = vst.msk [vmem:[#allocation2 + $0x88] sm:$0xff] %vm1327, %v1280
      %1346 = vst.msk [vmem:[#allocation2 + $0x90] sm:$0xff] %vm1327, %v1281
      %1347 = vst.msk [vmem:[#allocation2 + $0x98] sm:$0xff] %vm1327, %v1282
      %1348 = vst.msk [vmem:[#allocation2 + $0xa0] sm:$0xff] %vm1327, %v1283
      %1349 = vst.msk [vmem:[#allocation2 + $0xa8] sm:$0xff] %vm1327, %v1284
      %1350 = vst.msk [vmem:[#allocation2 + $0xb0] sm:$0xff] %vm1327, %v1285
      %1351 = vst.msk [vmem:[#allocation2 + $0xb8] sm:$0xff] %vm1327, %v1286
      %1352 = vst.msk [vmem:[#allocation2 + $0xc0] sm:$0xff] %vm1327, %v1287
      %1353 = vst.msk [vmem:[#allocation2 + $0xc8] sm:$0xff] %vm1327, %v1288
      %1354 = vst.msk [vmem:[#allocation2 + $0xd0] sm:$0xff] %vm1327, %v1289
      %1355 = vst.msk [vmem:[#allocation2 + $0xd8] sm:$0xff] %vm1327, %v1290
      %1356 = vst.msk [vmem:[#allocation2 + $0xe0] sm:$0xff] %vm1327, %v1291
      %1357 = vst.msk [vmem:[#allocation2 + $0xe8] sm:$0xff] %vm1327, %v1292
      %1358 = vst.msk [vmem:[#allocation2 + $0xf0] sm:$0xff] %vm1327, %v1293
      %1359 = vst.msk [vmem:[#allocation2 + $0xf8] sm:$0xff] %vm1327, %v1294
      %1360 = vst.msk [vmem:[#allocation2 + $0x100] sm:$0xff] %vm1327, %v1295
      %1361 = vst.msk [vmem:[#allocation2 + $0x108] sm:$0xff] %vm1327, %v1296
      %1362 = vst.msk [vmem:[#allocation2 + $0x110] sm:$0xff] %vm1327, %v1297
      %1363 = vst.msk [vmem:[#allocation2 + $0x118] sm:$0xff] %vm1327, %v1298
      %1364 = vst.msk [vmem:[#allocation2 + $0x120] sm:$0xff] %vm1327, %v1299
      %1365 = vst.msk [vmem:[#allocation2 + $0x128] sm:$0xff] %vm1327, %v1300
      %1366 = vst.msk [vmem:[#allocation2 + $0x130] sm:$0xff] %vm1327, %v1301
      %1367 = vst.msk [vmem:[#allocation2 + $0x138] sm:$0xff] %vm1327, %v1302
      %1368 = vst.msk [vmem:[#allocation2 + $0x140] sm:$0xff] %vm1327, %v1303
      %1369 = vst.msk [vmem:[#allocation2 + $0x148] sm:$0xff] %vm1327, %v1304
      %1370 = vst.msk [vmem:[#allocation2 + $0x150] sm:$0xff] %vm1327, %v1305
      %1371 = vst.msk [vmem:[#allocation2 + $0x158] sm:$0xff] %vm1327, %v1306
      %1372 = vst.msk [vmem:[#allocation2 + $0x160] sm:$0xff] %vm1327, %v1307
      %1373 = vst.msk [vmem:[#allocation2 + $0x168] sm:$0xff] %vm1327, %v1308
      %1374 = vst.msk [vmem:[#allocation2 + $0x170] sm:$0xff] %vm1327, %v1309
      %1375 = vst.msk [vmem:[#allocation2 + $0x178] sm:$0xff] %vm1327, %v1310
      %1376 = vst.msk [vmem:[#allocation2 + $0x180] sm:$0xff] %vm1327, %v1311
      %1377 = vst.msk [vmem:[#allocation2 + $0x188] sm:$0xff] %vm1327, %v1312
      %1378 = vst.msk [vmem:[#allocation2 + $0x190] sm:$0xff] %vm1327, %v1313
      %1379 = vst.msk [vmem:[#allocation2 + $0x198] sm:$0xff] %vm1327, %v1314
      %1380 = vst.msk [vmem:[#allocation2 + $0x1a0] sm:$0xff] %vm1327, %v1315
      %1381 = vst.msk [vmem:[#allocation2 + $0x1a8] sm:$0xff] %vm1327, %v1316
      %1382 = vst.msk [vmem:[#allocation2 + $0x1b0] sm:$0xff] %vm1327, %v1317
      %1383 = vst.msk [vmem:[#allocation2 + $0x1b8] sm:$0xff] %vm1327, %v1318
      %1384 = vst.msk [vmem:[#allocation2 + $0x1c0] sm:$0xff] %vm1327, %v1319
      %1385 = vst.msk [vmem:[#allocation2 + $0x1c8] sm:$0xff] %vm1327, %v1320
      %1386 = vst.msk [vmem:[#allocation2 + $0x1d0] sm:$0xff] %vm1327, %v1321
      %1387 = vst.msk [vmem:[#allocation2 + $0x1d8] sm:$0xff] %vm1327, %v1322
      %1388 = vst.msk [vmem:[#allocation2 + $0x1e0] sm:$0xff] %vm1327, %v1323
      %1389 = vst.msk [vmem:[#allocation2 + $0x1e8] sm:$0xff] %vm1327, %v1324
      %1390 = vst.msk [vmem:[#allocation2 + $0x1f0] sm:$0xff] %vm1327, %v1325
      %1391 = vst.msk [vmem:[#allocation2 + $0x1f8] sm:$0xff] %vm1327, %v1326
      // Predicated region
      $region41: #{matmul_bn_act.1} parent=35 // pred_check
        %p1392 = pneg %p309
      $region42: #{matmul_bn_act.1} parent=35 // pred_check_branch
        %1394 = sbr.rel (%p1392) target = $region44
      $region43: #{matmul_bn_act.1} parent=35 // pred_region
        %v1395 = vld [vmem:[#allocation2] sm:$0xff]
        %v1396 = vld [vmem:[#allocation2 + $0x8] sm:$0xff]
        %v1397 = vld [vmem:[#allocation2 + $0x10] sm:$0xff]
        %v1398 = vld [vmem:[#allocation2 + $0x18] sm:$0xff]
        %v1399 = vld [vmem:[#allocation2 + $0x20] sm:$0xff]
        %v1400 = vld [vmem:[#allocation2 + $0x28] sm:$0xff]
        %v1401 = vld [vmem:[#allocation2 + $0x30] sm:$0xff]
        %v1402 = vld [vmem:[#allocation2 + $0x38] sm:$0xff]
        %v1403 = vld [vmem:[#allocation2 + $0x40] sm:$0xff]
        %v1404 = vld [vmem:[#allocation2 + $0x48] sm:$0xff]
        %v1405 = vld [vmem:[#allocation2 + $0x50] sm:$0xff]
        %v1406 = vld [vmem:[#allocation2 + $0x58] sm:$0xff]
        %v1407 = vld [vmem:[#allocation2 + $0x60] sm:$0xff]
        %v1408 = vld [vmem:[#allocation2 + $0x68] sm:$0xff]
        %v1409 = vld [vmem:[#allocation2 + $0x70] sm:$0xff]
        %v1410 = vld [vmem:[#allocation2 + $0x78] sm:$0xff]
        %v1411 = vld [vmem:[#allocation2 + $0x80] sm:$0xff]
        %v1412 = vld [vmem:[#allocation2 + $0x88] sm:$0xff]
        %v1413 = vld [vmem:[#allocation2 + $0x90] sm:$0xff]
        %v1414 = vld [vmem:[#allocation2 + $0x98] sm:$0xff]
        %v1415 = vld [vmem:[#allocation2 + $0xa0] sm:$0xff]
        %v1416 = vld [vmem:[#allocation2 + $0xa8] sm:$0xff]
        %v1417 = vld [vmem:[#allocation2 + $0xb0] sm:$0xff]
        %v1418 = vld [vmem:[#allocation2 + $0xb8] sm:$0xff]
        %v1419 = vld [vmem:[#allocation2 + $0xc0] sm:$0xff]
        %v1420 = vld [vmem:[#allocation2 + $0xc8] sm:$0xff]
        %v1421 = vld [vmem:[#allocation2 + $0xd0] sm:$0xff]
        %v1422 = vld [vmem:[#allocation2 + $0xd8] sm:$0xff]
        %v1423 = vld [vmem:[#allocation2 + $0xe0] sm:$0xff]
        %v1424 = vld [vmem:[#allocation2 + $0xe8] sm:$0xff]
        %v1425 = vld [vmem:[#allocation2 + $0xf0] sm:$0xff]
        %v1426 = vld [vmem:[#allocation2 + $0xf8] sm:$0xff]
        %v1427 = vld [vmem:[#allocation2 + $0x100] sm:$0xff]
        %v1428 = vld [vmem:[#allocation2 + $0x108] sm:$0xff]
        %v1429 = vld [vmem:[#allocation2 + $0x110] sm:$0xff]
        %v1430 = vld [vmem:[#allocation2 + $0x118] sm:$0xff]
        %v1431 = vld [vmem:[#allocation2 + $0x120] sm:$0xff]
        %v1432 = vld [vmem:[#allocation2 + $0x128] sm:$0xff]
        %v1433 = vld [vmem:[#allocation2 + $0x130] sm:$0xff]
        %v1434 = vld [vmem:[#allocation2 + $0x138] sm:$0xff]
        %v1435 = vld [vmem:[#allocation2 + $0x140] sm:$0xff]
        %v1436 = vld [vmem:[#allocation2 + $0x148] sm:$0xff]
        %v1437 = vld [vmem:[#allocation2 + $0x150] sm:$0xff]
        %v1438 = vld [vmem:[#allocation2 + $0x158] sm:$0xff]
        %v1439 = vld [vmem:[#allocation2 + $0x160] sm:$0xff]
        %v1440 = vld [vmem:[#allocation2 + $0x168] sm:$0xff]
        %v1441 = vld [vmem:[#allocation2 + $0x170] sm:$0xff]
        %v1442 = vld [vmem:[#allocation2 + $0x178] sm:$0xff]
        %v1443 = vld [vmem:[#allocation2 + $0x180] sm:$0xff]
        %v1444 = vld [vmem:[#allocation2 + $0x188] sm:$0xff]
        %v1445 = vld [vmem:[#allocation2 + $0x190] sm:$0xff]
        %v1446 = vld [vmem:[#allocation2 + $0x198] sm:$0xff]
        %v1447 = vld [vmem:[#allocation2 + $0x1a0] sm:$0xff]
        %v1448 = vld [vmem:[#allocation2 + $0x1a8] sm:$0xff]
        %v1449 = vld [vmem:[#allocation2 + $0x1b0] sm:$0xff]
        %v1450 = vld [vmem:[#allocation2 + $0x1b8] sm:$0xff]
        %v1451 = vld [vmem:[#allocation2 + $0x1c0] sm:$0xff]
        %v1452 = vld [vmem:[#allocation2 + $0x1c8] sm:$0xff]
        %v1453 = vld [vmem:[#allocation2 + $0x1d0] sm:$0xff]
        %v1454 = vld [vmem:[#allocation2 + $0x1d8] sm:$0xff]
        %v1455 = vld [vmem:[#allocation2 + $0x1e0] sm:$0xff]
        %v1456 = vld [vmem:[#allocation2 + $0x1e8] sm:$0xff]
        %v1457 = vld [vmem:[#allocation2 + $0x1f0] sm:$0xff]
        %v1458 = vld [vmem:[#allocation2 + $0x1f8] sm:$0xff]
        %v1459 = vld [vmem:[%s295] sm:$0x1]
        %v1461 = vlaneseq
        %v1462 = vshrl.u32 %v1461, 7
        %v1463 = vsub.s32 0, %v1462
        %v1464 = vrot.slane %v1459, %v1463
        %v1466 = vmul.f32 %v1395, %v1464
        %v1467 = vmul.f32 %v1396, %v1464
        %v1468 = vmul.f32 %v1397, %v1464
        %v1469 = vmul.f32 %v1398, %v1464
        %v1470 = vmul.f32 %v1399, %v1464
        %v1471 = vmul.f32 %v1400, %v1464
        %v1472 = vmul.f32 %v1401, %v1464
        %v1473 = vmul.f32 %v1402, %v1464
        %v1474 = vmul.f32 %v1403, %v1464
        %v1475 = vmul.f32 %v1404, %v1464
        %v1476 = vmul.f32 %v1405, %v1464
        %v1477 = vmul.f32 %v1406, %v1464
        %v1478 = vmul.f32 %v1407, %v1464
        %v1479 = vmul.f32 %v1408, %v1464
        %v1480 = vmul.f32 %v1409, %v1464
        %v1481 = vmul.f32 %v1410, %v1464
        %v1482 = vmul.f32 %v1411, %v1464
        %v1483 = vmul.f32 %v1412, %v1464
        %v1484 = vmul.f32 %v1413, %v1464
        %v1485 = vmul.f32 %v1414, %v1464
        %v1486 = vmul.f32 %v1415, %v1464
        %v1487 = vmul.f32 %v1416, %v1464
        %v1488 = vmul.f32 %v1417, %v1464
        %v1489 = vmul.f32 %v1418, %v1464
        %v1490 = vmul.f32 %v1419, %v1464
        %v1491 = vmul.f32 %v1420, %v1464
        %v1492 = vmul.f32 %v1421, %v1464
        %v1493 = vmul.f32 %v1422, %v1464
        %v1494 = vmul.f32 %v1423, %v1464
        %v1495 = vmul.f32 %v1424, %v1464
        %v1496 = vmul.f32 %v1425, %v1464
        %v1497 = vmul.f32 %v1426, %v1464
        %v1498 = vmul.f32 %v1427, %v1464
        %v1499 = vmul.f32 %v1428, %v1464
        %v1500 = vmul.f32 %v1429, %v1464
        %v1501 = vmul.f32 %v1430, %v1464
        %v1502 = vmul.f32 %v1431, %v1464
        %v1503 = vmul.f32 %v1432, %v1464
        %v1504 = vmul.f32 %v1433, %v1464
        %v1505 = vmul.f32 %v1434, %v1464
        %v1506 = vmul.f32 %v1435, %v1464
        %v1507 = vmul.f32 %v1436, %v1464
        %v1508 = vmul.f32 %v1437, %v1464
        %v1509 = vmul.f32 %v1438, %v1464
        %v1510 = vmul.f32 %v1439, %v1464
        %v1511 = vmul.f32 %v1440, %v1464
        %v1512 = vmul.f32 %v1441, %v1464
        %v1513 = vmul.f32 %v1442, %v1464
        %v1514 = vmul.f32 %v1443, %v1464
        %v1515 = vmul.f32 %v1444, %v1464
        %v1516 = vmul.f32 %v1445, %v1464
        %v1517 = vmul.f32 %v1446, %v1464
        %v1518 = vmul.f32 %v1447, %v1464
        %v1519 = vmul.f32 %v1448, %v1464
        %v1520 = vmul.f32 %v1449, %v1464
        %v1521 = vmul.f32 %v1450, %v1464
        %v1522 = vmul.f32 %v1451, %v1464
        %v1523 = vmul.f32 %v1452, %v1464
        %v1524 = vmul.f32 %v1453, %v1464
        %v1525 = vmul.f32 %v1454, %v1464
        %v1526 = vmul.f32 %v1455, %v1464
        %v1527 = vmul.f32 %v1456, %v1464
        %v1528 = vmul.f32 %v1457, %v1464
        %v1529 = vmul.f32 %v1458, %v1464
        %v1530 = vld [vmem:[%s298] sm:$0x1]
        %v1532 = vlaneseq
        %v1533 = vshrl.u32 %v1532, 7
        %v1534 = vsub.s32 0, %v1533
        %v1535 = vrot.slane %v1530, %v1534
        %v1537 = vadd.f32 %v1466, %v1535
        %v1538 = vadd.f32 %v1467, %v1535
        %v1539 = vadd.f32 %v1468, %v1535
        %v1540 = vadd.f32 %v1469, %v1535
        %v1541 = vadd.f32 %v1470, %v1535
        %v1542 = vadd.f32 %v1471, %v1535
        %v1543 = vadd.f32 %v1472, %v1535
        %v1544 = vadd.f32 %v1473, %v1535
        %v1545 = vadd.f32 %v1474, %v1535
        %v1546 = vadd.f32 %v1475, %v1535
        %v1547 = vadd.f32 %v1476, %v1535
        %v1548 = vadd.f32 %v1477, %v1535
        %v1549 = vadd.f32 %v1478, %v1535
        %v1550 = vadd.f32 %v1479, %v1535
        %v1551 = vadd.f32 %v1480, %v1535
        %v1552 = vadd.f32 %v1481, %v1535
        %v1553 = vadd.f32 %v1482, %v1535
        %v1554 = vadd.f32 %v1483, %v1535
        %v1555 = vadd.f32 %v1484, %v1535
        %v1556 = vadd.f32 %v1485, %v1535
        %v1557 = vadd.f32 %v1486, %v1535
        %v1558 = vadd.f32 %v1487, %v1535
        %v1559 = vadd.f32 %v1488, %v1535
        %v1560 = vadd.f32 %v1489, %v1535
        %v1561 = vadd.f32 %v1490, %v1535
        %v1562 = vadd.f32 %v1491, %v1535
        %v1563 = vadd.f32 %v1492, %v1535
        %v1564 = vadd.f32 %v1493, %v1535
        %v1565 = vadd.f32 %v1494, %v1535
        %v1566 = vadd.f32 %v1495, %v1535
        %v1567 = vadd.f32 %v1496, %v1535
        %v1568 = vadd.f32 %v1497, %v1535
        %v1569 = vadd.f32 %v1498, %v1535
        %v1570 = vadd.f32 %v1499, %v1535
        %v1571 = vadd.f32 %v1500, %v1535
        %v1572 = vadd.f32 %v1501, %v1535
        %v1573 = vadd.f32 %v1502, %v1535
        %v1574 = vadd.f32 %v1503, %v1535
        %v1575 = vadd.f32 %v1504, %v1535
        %v1576 = vadd.f32 %v1505, %v1535
        %v1577 = vadd.f32 %v1506, %v1535
        %v1578 = vadd.f32 %v1507, %v1535
        %v1579 = vadd.f32 %v1508, %v1535
        %v1580 = vadd.f32 %v1509, %v1535
        %v1581 = vadd.f32 %v1510, %v1535
        %v1582 = vadd.f32 %v1511, %v1535
        %v1583 = vadd.f32 %v1512, %v1535
        %v1584 = vadd.f32 %v1513, %v1535
        %v1585 = vadd.f32 %v1514, %v1535
        %v1586 = vadd.f32 %v1515, %v1535
        %v1587 = vadd.f32 %v1516, %v1535
        %v1588 = vadd.f32 %v1517, %v1535
        %v1589 = vadd.f32 %v1518, %v1535
        %v1590 = vadd.f32 %v1519, %v1535
        %v1591 = vadd.f32 %v1520, %v1535
        %v1592 = vadd.f32 %v1521, %v1535
        %v1593 = vadd.f32 %v1522, %v1535
        %v1594 = vadd.f32 %v1523, %v1535
        %v1595 = vadd.f32 %v1524, %v1535
        %v1596 = vadd.f32 %v1525, %v1535
        %v1597 = vadd.f32 %v1526, %v1535
        %v1598 = vadd.f32 %v1527, %v1535
        %v1599 = vadd.f32 %v1528, %v1535
        %v1600 = vadd.f32 %v1529, %v1535
        %v1601 = vmax.f32 %v1537, 0.0
        %v1602 = vmax.f32 %v1538, 0.0
        %v1603 = vmax.f32 %v1539, 0.0
        %v1604 = vmax.f32 %v1540, 0.0
        %v1605 = vmax.f32 %v1541, 0.0
        %v1606 = vmax.f32 %v1542, 0.0
        %v1607 = vmax.f32 %v1543, 0.0
        %v1608 = vmax.f32 %v1544, 0.0
        %v1609 = vmax.f32 %v1545, 0.0
        %v1610 = vmax.f32 %v1546, 0.0
        %v1611 = vmax.f32 %v1547, 0.0
        %v1612 = vmax.f32 %v1548, 0.0
        %v1613 = vmax.f32 %v1549, 0.0
        %v1614 = vmax.f32 %v1550, 0.0
        %v1615 = vmax.f32 %v1551, 0.0
        %v1616 = vmax.f32 %v1552, 0.0
        %v1617 = vmax.f32 %v1553, 0.0
        %v1618 = vmax.f32 %v1554, 0.0
        %v1619 = vmax.f32 %v1555, 0.0
        %v1620 = vmax.f32 %v1556, 0.0
        %v1621 = vmax.f32 %v1557, 0.0
        %v1622 = vmax.f32 %v1558, 0.0
        %v1623 = vmax.f32 %v1559, 0.0
        %v1624 = vmax.f32 %v1560, 0.0
        %v1625 = vmax.f32 %v1561, 0.0
        %v1626 = vmax.f32 %v1562, 0.0
        %v1627 = vmax.f32 %v1563, 0.0
        %v1628 = vmax.f32 %v1564, 0.0
        %v1629 = vmax.f32 %v1565, 0.0
        %v1630 = vmax.f32 %v1566, 0.0
        %v1631 = vmax.f32 %v1567, 0.0
        %v1632 = vmax.f32 %v1568, 0.0
        %v1633 = vmax.f32 %v1569, 0.0
        %v1634 = vmax.f32 %v1570, 0.0
        %v1635 = vmax.f32 %v1571, 0.0
        %v1636 = vmax.f32 %v1572, 0.0
        %v1637 = vmax.f32 %v1573, 0.0
        %v1638 = vmax.f32 %v1574, 0.0
        %v1639 = vmax.f32 %v1575, 0.0
        %v1640 = vmax.f32 %v1576, 0.0
        %v1641 = vmax.f32 %v1577, 0.0
        %v1642 = vmax.f32 %v1578, 0.0
        %v1643 = vmax.f32 %v1579, 0.0
        %v1644 = vmax.f32 %v1580, 0.0
        %v1645 = vmax.f32 %v1581, 0.0
        %v1646 = vmax.f32 %v1582, 0.0
        %v1647 = vmax.f32 %v1583, 0.0
        %v1648 = vmax.f32 %v1584, 0.0
        %v1649 = vmax.f32 %v1585, 0.0
        %v1650 = vmax.f32 %v1586, 0.0
        %v1651 = vmax.f32 %v1587, 0.0
        %v1652 = vmax.f32 %v1588, 0.0
        %v1653 = vmax.f32 %v1589, 0.0
        %v1654 = vmax.f32 %v1590, 0.0
        %v1655 = vmax.f32 %v1591, 0.0
        %v1656 = vmax.f32 %v1592, 0.0
        %v1657 = vmax.f32 %v1593, 0.0
        %v1658 = vmax.f32 %v1594, 0.0
        %v1659 = vmax.f32 %v1595, 0.0
        %v1660 = vmax.f32 %v1596, 0.0
        %v1661 = vmax.f32 %v1597, 0.0
        %v1662 = vmax.f32 %v1598, 0.0
        %v1663 = vmax.f32 %v1599, 0.0
        %v1664 = vmax.f32 %v1600, 0.0
        %v1665 = vpack.c.bf16 %v1602, %v1601
        %v1666 = vpack.c.bf16 %v1604, %v1603
        %v1667 = vpack.c.bf16 %v1606, %v1605
        %v1668 = vpack.c.bf16 %v1608, %v1607
        %v1669 = vpack.c.bf16 %v1610, %v1609
        %v1670 = vpack.c.bf16 %v1612, %v1611
        %v1671 = vpack.c.bf16 %v1614, %v1613
        %v1672 = vpack.c.bf16 %v1616, %v1615
        %v1673 = vpack.c.bf16 %v1618, %v1617
        %v1674 = vpack.c.bf16 %v1620, %v1619
        %v1675 = vpack.c.bf16 %v1622, %v1621
        %v1676 = vpack.c.bf16 %v1624, %v1623
        %v1677 = vpack.c.bf16 %v1626, %v1625
        %v1678 = vpack.c.bf16 %v1628, %v1627
        %v1679 = vpack.c.bf16 %v1630, %v1629
        %v1680 = vpack.c.bf16 %v1632, %v1631
        %v1681 = vpack.c.bf16 %v1634, %v1633
        %v1682 = vpack.c.bf16 %v1636, %v1635
        %v1683 = vpack.c.bf16 %v1638, %v1637
        %v1684 = vpack.c.bf16 %v1640, %v1639
        %v1685 = vpack.c.bf16 %v1642, %v1641
        %v1686 = vpack.c.bf16 %v1644, %v1643
        %v1687 = vpack.c.bf16 %v1646, %v1645
        %v1688 = vpack.c.bf16 %v1648, %v1647
        %v1689 = vpack.c.bf16 %v1650, %v1649
        %v1690 = vpack.c.bf16 %v1652, %v1651
        %v1691 = vpack.c.bf16 %v1654, %v1653
        %v1692 = vpack.c.bf16 %v1656, %v1655
        %v1693 = vpack.c.bf16 %v1658, %v1657
        %v1694 = vpack.c.bf16 %v1660, %v1659
        %v1695 = vpack.c.bf16 %v1662, %v1661
        %v1696 = vpack.c.bf16 %v1664, %v1663
        %v1729 = vunpack.c.l.b16 %v1665
        %v1730 = vunpack.c.h.b16 %v1665
        %v1731 = vunpack.c.l.b16 %v1666
        %v1732 = vunpack.c.h.b16 %v1666
        %v1733 = vunpack.c.l.b16 %v1667
        %v1734 = vunpack.c.h.b16 %v1667
        %v1735 = vunpack.c.l.b16 %v1668
        %v1736 = vunpack.c.h.b16 %v1668
        %v1737 = vunpack.c.l.b16 %v1669
        %v1738 = vunpack.c.h.b16 %v1669
        %v1739 = vunpack.c.l.b16 %v1670
        %v1740 = vunpack.c.h.b16 %v1670
        %v1741 = vunpack.c.l.b16 %v1671
        %v1742 = vunpack.c.h.b16 %v1671
        %v1743 = vunpack.c.l.b16 %v1672
        %v1744 = vunpack.c.h.b16 %v1672
        %v1745 = vunpack.c.l.b16 %v1673
        %v1746 = vunpack.c.h.b16 %v1673
        %v1747 = vunpack.c.l.b16 %v1674
        %v1748 = vunpack.c.h.b16 %v1674
        %v1749 = vunpack.c.l.b16 %v1675
        %v1750 = vunpack.c.h.b16 %v1675
        %v1751 = vunpack.c.l.b16 %v1676
        %v1752 = vunpack.c.h.b16 %v1676
        %v1753 = vunpack.c.l.b16 %v1677
        %v1754 = vunpack.c.h.b16 %v1677
        %v1755 = vunpack.c.l.b16 %v1678
        %v1756 = vunpack.c.h.b16 %v1678
        %v1757 = vunpack.c.l.b16 %v1679
        %v1758 = vunpack.c.h.b16 %v1679
        %v1759 = vunpack.c.l.b16 %v1680
        %v1760 = vunpack.c.h.b16 %v1680
        %v1761 = vunpack.c.l.b16 %v1681
        %v1762 = vunpack.c.h.b16 %v1681
        %v1763 = vunpack.c.l.b16 %v1682
        %v1764 = vunpack.c.h.b16 %v1682
        %v1765 = vunpack.c.l.b16 %v1683
        %v1766 = vunpack.c.h.b16 %v1683
        %v1767 = vunpack.c.l.b16 %v1684
        %v1768 = vunpack.c.h.b16 %v1684
        %v1769 = vunpack.c.l.b16 %v1685
        %v1770 = vunpack.c.h.b16 %v1685
        %v1771 = vunpack.c.l.b16 %v1686
        %v1772 = vunpack.c.h.b16 %v1686
        %v1773 = vunpack.c.l.b16 %v1687
        %v1774 = vunpack.c.h.b16 %v1687
        %v1775 = vunpack.c.l.b16 %v1688
        %v1776 = vunpack.c.h.b16 %v1688
        %v1777 = vunpack.c.l.b16 %v1689
        %v1778 = vunpack.c.h.b16 %v1689
        %v1779 = vunpack.c.l.b16 %v1690
        %v1780 = vunpack.c.h.b16 %v1690
        %v1781 = vunpack.c.l.b16 %v1691
        %v1782 = vunpack.c.h.b16 %v1691
        %v1783 = vunpack.c.l.b16 %v1692
        %v1784 = vunpack.c.h.b16 %v1692
        %v1785 = vunpack.c.l.b16 %v1693
        %v1786 = vunpack.c.h.b16 %v1693
        %v1787 = vunpack.c.l.b16 %v1694
        %v1788 = vunpack.c.h.b16 %v1694
        %v1789 = vunpack.c.l.b16 %v1695
        %v1790 = vunpack.c.h.b16 %v1695
        %v1791 = vunpack.c.l.b16 %v1696
        %v1792 = vunpack.c.h.b16 %v1696
        %v1793 = vpack.c.b16 %v1729, %v1729
        %v1794 = vpack.c.b16 %v1730, %v1730
        %v1795 = vpack.c.b16 %v1731, %v1731
        %v1796 = vpack.c.b16 %v1732, %v1732
        %v1797 = vpack.c.b16 %v1733, %v1733
        %v1798 = vpack.c.b16 %v1734, %v1734
        %v1799 = vpack.c.b16 %v1735, %v1735
        %v1800 = vpack.c.b16 %v1736, %v1736
        %v1801 = vpack.c.b16 %v1737, %v1737
        %v1802 = vpack.c.b16 %v1738, %v1738
        %v1803 = vpack.c.b16 %v1739, %v1739
        %v1804 = vpack.c.b16 %v1740, %v1740
        %v1805 = vpack.c.b16 %v1741, %v1741
        %v1806 = vpack.c.b16 %v1742, %v1742
        %v1807 = vpack.c.b16 %v1743, %v1743
        %v1808 = vpack.c.b16 %v1744, %v1744
        %v1809 = vpack.c.b16 %v1745, %v1745
        %v1810 = vpack.c.b16 %v1746, %v1746
        %v1811 = vpack.c.b16 %v1747, %v1747
        %v1812 = vpack.c.b16 %v1748, %v1748
        %v1813 = vpack.c.b16 %v1749, %v1749
        %v1814 = vpack.c.b16 %v1750, %v1750
        %v1815 = vpack.c.b16 %v1751, %v1751
        %v1816 = vpack.c.b16 %v1752, %v1752
        %v1817 = vpack.c.b16 %v1753, %v1753
        %v1818 = vpack.c.b16 %v1754, %v1754
        %v1819 = vpack.c.b16 %v1755, %v1755
        %v1820 = vpack.c.b16 %v1756, %v1756
        %v1821 = vpack.c.b16 %v1757, %v1757
        %v1822 = vpack.c.b16 %v1758, %v1758
        %v1823 = vpack.c.b16 %v1759, %v1759
        %v1824 = vpack.c.b16 %v1760, %v1760
        %v1825 = vpack.c.b16 %v1761, %v1761
        %v1826 = vpack.c.b16 %v1762, %v1762
        %v1827 = vpack.c.b16 %v1763, %v1763
        %v1828 = vpack.c.b16 %v1764, %v1764
        %v1829 = vpack.c.b16 %v1765, %v1765
        %v1830 = vpack.c.b16 %v1766, %v1766
        %v1831 = vpack.c.b16 %v1767, %v1767
        %v1832 = vpack.c.b16 %v1768, %v1768
        %v1833 = vpack.c.b16 %v1769, %v1769
        %v1834 = vpack.c.b16 %v1770, %v1770
        %v1835 = vpack.c.b16 %v1771, %v1771
        %v1836 = vpack.c.b16 %v1772, %v1772
        %v1837 = vpack.c.b16 %v1773, %v1773
        %v1838 = vpack.c.b16 %v1774, %v1774
        %v1839 = vpack.c.b16 %v1775, %v1775
        %v1840 = vpack.c.b16 %v1776, %v1776
        %v1841 = vpack.c.b16 %v1777, %v1777
        %v1842 = vpack.c.b16 %v1778, %v1778
        %v1843 = vpack.c.b16 %v1779, %v1779
        %v1844 = vpack.c.b16 %v1780, %v1780
        %v1845 = vpack.c.b16 %v1781, %v1781
        %v1846 = vpack.c.b16 %v1782, %v1782
        %v1847 = vpack.c.b16 %v1783, %v1783
        %v1848 = vpack.c.b16 %v1784, %v1784
        %v1849 = vpack.c.b16 %v1785, %v1785
        %v1850 = vpack.c.b16 %v1786, %v1786
        %v1851 = vpack.c.b16 %v1787, %v1787
        %v1852 = vpack.c.b16 %v1788, %v1788
        %v1853 = vpack.c.b16 %v1789, %v1789
        %v1854 = vpack.c.b16 %v1790, %v1790
        %v1855 = vpack.c.b16 %v1791, %v1791
        %v1856 = vpack.c.b16 %v1792, %v1792
        %vm1921 = vcmask 519168
        %1922 = vst.msk [vmem:[%s306] sm:$0xf] %vm1921, %v1793
        %1923 = vst.msk [vmem:[%s306 + $0x4] sm:$0xf] %vm1921, %v1794
        %1924 = vst.msk [vmem:[%s306 + $0x8] sm:$0xf] %vm1921, %v1795
        %1925 = vst.msk [vmem:[%s306 + $0xc] sm:$0xf] %vm1921, %v1796
        %1926 = vst.msk [vmem:[%s306 + $0x10] sm:$0xf] %vm1921, %v1797
        %1927 = vst.msk [vmem:[%s306 + $0x14] sm:$0xf] %vm1921, %v1798
        %1928 = vst.msk [vmem:[%s306 + $0x18] sm:$0xf] %vm1921, %v1799
        %1929 = vst.msk [vmem:[%s306 + $0x1c] sm:$0xf] %vm1921, %v1800
        %1930 = vst.msk [vmem:[%s306 + $0x20] sm:$0xf] %vm1921, %v1801
        %1931 = vst.msk [vmem:[%s306 + $0x24] sm:$0xf] %vm1921, %v1802
        %1932 = vst.msk [vmem:[%s306 + $0x28] sm:$0xf] %vm1921, %v1803
        %1933 = vst.msk [vmem:[%s306 + $0x2c] sm:$0xf] %vm1921, %v1804
        %1934 = vst.msk [vmem:[%s306 + $0x30] sm:$0xf] %vm1921, %v1805
        %1935 = vst.msk [vmem:[%s306 + $0x34] sm:$0xf] %vm1921, %v1806
        %1936 = vst.msk [vmem:[%s306 + $0x38] sm:$0xf] %vm1921, %v1807
        %1937 = vst.msk [vmem:[%s306 + $0x3c] sm:$0xf] %vm1921, %v1808
        %1938 = vst.msk [vmem:[%s306 + $0x40] sm:$0xf] %vm1921, %v1809
        %1939 = vst.msk [vmem:[%s306 + $0x44] sm:$0xf] %vm1921, %v1810
        %1940 = vst.msk [vmem:[%s306 + $0x48] sm:$0xf] %vm1921, %v1811
        %1941 = vst.msk [vmem:[%s306 + $0x4c] sm:$0xf] %vm1921, %v1812
        %1942 = vst.msk [vmem:[%s306 + $0x50] sm:$0xf] %vm1921, %v1813
        %1943 = vst.msk [vmem:[%s306 + $0x54] sm:$0xf] %vm1921, %v1814
        %1944 = vst.msk [vmem:[%s306 + $0x58] sm:$0xf] %vm1921, %v1815
        %1945 = vst.msk [vmem:[%s306 + $0x5c] sm:$0xf] %vm1921, %v1816
        %1946 = vst.msk [vmem:[%s306 + $0x60] sm:$0xf] %vm1921, %v1817
        %1947 = vst.msk [vmem:[%s306 + $0x64] sm:$0xf] %vm1921, %v1818
        %1948 = vst.msk [vmem:[%s306 + $0x68] sm:$0xf] %vm1921, %v1819
        %1949 = vst.msk [vmem:[%s306 + $0x6c] sm:$0xf] %vm1921, %v1820
        %1950 = vst.msk [vmem:[%s306 + $0x70] sm:$0xf] %vm1921, %v1821
        %1951 = vst.msk [vmem:[%s306 + $0x74] sm:$0xf] %vm1921, %v1822
        %1952 = vst.msk [vmem:[%s306 + $0x78] sm:$0xf] %vm1921, %v1823
        %1953 = vst.msk [vmem:[%s306 + $0x7c] sm:$0xf] %vm1921, %v1824
        %1954 = vst.msk [vmem:[%s306 + $0x80] sm:$0xf] %vm1921, %v1825
        %1955 = vst.msk [vmem:[%s306 + $0x84] sm:$0xf] %vm1921, %v1826
        %1956 = vst.msk [vmem:[%s306 + $0x88] sm:$0xf] %vm1921, %v1827
        %1957 = vst.msk [vmem:[%s306 + $0x8c] sm:$0xf] %vm1921, %v1828
        %1958 = vst.msk [vmem:[%s306 + $0x90] sm:$0xf] %vm1921, %v1829
        %1959 = vst.msk [vmem:[%s306 + $0x94] sm:$0xf] %vm1921, %v1830
        %1960 = vst.msk [vmem:[%s306 + $0x98] sm:$0xf] %vm1921, %v1831
        %1961 = vst.msk [vmem:[%s306 + $0x9c] sm:$0xf] %vm1921, %v1832
        %1962 = vst.msk [vmem:[%s306 + $0xa0] sm:$0xf] %vm1921, %v1833
        %1963 = vst.msk [vmem:[%s306 + $0xa4] sm:$0xf] %vm1921, %v1834
        %1964 = vst.msk [vmem:[%s306 + $0xa8] sm:$0xf] %vm1921, %v1835
        %1965 = vst.msk [vmem:[%s306 + $0xac] sm:$0xf] %vm1921, %v1836
        %1966 = vst.msk [vmem:[%s306 + $0xb0] sm:$0xf] %vm1921, %v1837
        %1967 = vst.msk [vmem:[%s306 + $0xb4] sm:$0xf] %vm1921, %v1838
        %1968 = vst.msk [vmem:[%s306 + $0xb8] sm:$0xf] %vm1921, %v1839
        %1969 = vst.msk [vmem:[%s306 + $0xbc] sm:$0xf] %vm1921, %v1840
        %1970 = vst.msk [vmem:[%s306 + $0xc0] sm:$0xf] %vm1921, %v1841
        %1971 = vst.msk [vmem:[%s306 + $0xc4] sm:$0xf] %vm1921, %v1842
        %1972 = vst.msk [vmem:[%s306 + $0xc8] sm:$0xf] %vm1921, %v1843
        %1973 = vst.msk [vmem:[%s306 + $0xcc] sm:$0xf] %vm1921, %v1844
        %1974 = vst.msk [vmem:[%s306 + $0xd0] sm:$0xf] %vm1921, %v1845
        %1975 = vst.msk [vmem:[%s306 + $0xd4] sm:$0xf] %vm1921, %v1846
        %1976 = vst.msk [vmem:[%s306 + $0xd8] sm:$0xf] %vm1921, %v1847
        %1977 = vst.msk [vmem:[%s306 + $0xdc] sm:$0xf] %vm1921, %v1848
        %1978 = vst.msk [vmem:[%s306 + $0xe0] sm:$0xf] %vm1921, %v1849
        %1979 = vst.msk [vmem:[%s306 + $0xe4] sm:$0xf] %vm1921, %v1850
        %1980 = vst.msk [vmem:[%s306 + $0xe8] sm:$0xf] %vm1921, %v1851
        %1981 = vst.msk [vmem:[%s306 + $0xec] sm:$0xf] %vm1921, %v1852
        %1982 = vst.msk [vmem:[%s306 + $0xf0] sm:$0xf] %vm1921, %v1853
        %1983 = vst.msk [vmem:[%s306 + $0xf4] sm:$0xf] %vm1921, %v1854
        %1984 = vst.msk [vmem:[%s306 + $0xf8] sm:$0xf] %vm1921, %v1855
        %1985 = vst.msk [vmem:[%s306 + $0xfc] sm:$0xf] %vm1921, %v1856
      $region44: #{matmul_bn_act.1} parent=35 // pred_fallthru
        _
      %s1986 = smul.u32 64, %s20
      %p1987 = scmp.lt.s32.totalorder %s1986, 255
      %s1988 = scalar_select %p1987, %s1986, 255
      %p1989 = scmp.lt.s32.totalorder %s21, 0
      %s1990 = scalar_select %p1989, %s21, 0
      %s1991 = sadd.s32 %s1990, %s1988
      %s1992 = smul.addr %s1991, 4
      %s1993 = scalar_lea.vmem %s4, %s1992
      // Predicated region
      $region45: #{matmul_bn_act.1} parent=35 // pred_check
        %p1994 = pneg %p162
      $region46: #{matmul_bn_act.1} parent=35 // pred_check_branch
        %1996 = sbr.rel (%p1994) target = $region48
      $region47: #{matmul_bn_act.1} parent=35 // pred_region
        %s1997 = smul.u32 64, %s20
      $region48: #{matmul_bn_act.1} parent=35 // pred_fallthru
        _
    $region36: #{matmul_bn_act.1} parent=5 // pred_fallthru
      _
    %p1998 = scmp.le.s32.totalorder 2, %s10
    // Predicated region
    $region49: #{matmul_bn_act.1} parent=5 // pred_check
      %p1999 = pneg %p1998
    $region50: #{matmul_bn_act.1} parent=5 // pred_check_branch
      %2001 = sbr.rel (%p1999) target = $region52
    $region51: #{matmul_bn_act.1} parent=5 // pred_region
      %s2002 = ssub.s32 %s10, 2
      // Predicated region
      $region53: #{matmul_bn_act.1} parent=51 // pred_check
        %p2003 = pneg %p168
      $region54: #{matmul_bn_act.1} parent=51 // pred_check_branch
        %2005 = sbr.rel (%p2003) target = $region56
      $region55: #{matmul_bn_act.1} parent=51 // pred_region
        %s2006 = smul.u32 64, %s23
        %p2007 = scmp.lt.s32.totalorder %s2006, 255
        %s2008 = scalar_select %p2007, %s2006, 255
        %p2009 = scmp.lt.s32.totalorder %s24, 0
        %s2010 = scalar_select %p2009, %s24, 0
        %s2011 = sadd.s32 %s2010, %s2008
        %s2012 = smul.addr %s2011, 4
        %s2013 = scalar_lea.vmem %s4, %s2012
      $region56: #{matmul_bn_act.1} parent=51 // pred_fallthru
        _
    $region52: #{matmul_bn_act.1} parent=5 // pred_fallthru
      _
  $region6: #{matmul_bn_act.1} parent=0 // loop_footer
    %s14 = sadd.s32 1, %s10
  $region7: #{matmul_bn_act.1} parent=0 // loop_footer_branch
    %9 = sbr.rel target = $region3
  $region8: #{matmul_bn_act.1} parent=0 // loop_exit
    _

</llo_original>
